<compile_context>
chip_gen: v5e
topology: v5e:2x2
jax: 0.10.0
libtpu: 0.0.40
codegen_flags: <defaults>
</compile_context>

<pallas_src>
import functools

import numpy as np
import jax
import jax.numpy as jnp
from jax.experimental import pallas as pl
from jax.experimental.pallas import tpu as pltpu


def _round_up(v, m):
    return (v + m - 1) // m * m


def _pad_amounts(kernel_size, dilation=1):
    if kernel_size % 2 == 0:
        pad_l = dilation * (kernel_size - 2) // 2 + 1
        pad_r = dilation * kernel_size // 2 + 1
    else:
        pad_l = dilation * (kernel_size - 1) // 2 + 1
        pad_r = dilation * (kernel_size - 1) // 2 + 1
    return pad_l, pad_r


# --------------------------- Pallas kernel (one tree depth) ------------------


def interactor_level_pallas(xe, xo, W1a, b1a, W2a, b2a, W1b, b1b, W2b, b2b,
                            *, b_tile=1):
    """All 2^d Interactor nodes (INN=True path) of one tree depth, one launch.

    xe, xo : (N, B, Cp, Th)     even / odd halves of every node (chan-padded)
    W1a    : (N, 2*Hp, 2*k*Cp)  block-diag im2col Conv1d(C->H, k) for (phi, psi)
    b1a    : (N, 2*Hp, 1)
    W2a    : (N, 2*Cp, 6*Hp)    block-diag im2col Conv1d(H->C, 3) for (phi, psi)
    b2a    : (N, 2*Cp, 1)
    W1b/b1b/W2b/b2b : same layout for the (U, P) pair.
    Returns (N, 2, B, Cp, Th): [:, 0] = x_even_update, [:, 1] = x_odd_update.
    """
    N, B, Cp, Th = xe.shape
    assert B % b_tile == 0
    bt = b_tile
    Hp2, kCp2 = W1a.shape[1], W1a.shape[2]
    Cp2, Hp6 = W2a.shape[1], W2a.shape[2]
    k = kCp2 // (2 * Cp)
    pad_l, pad_r = _pad_amounts(k)
    L1 = Th + pad_l + pad_r - (k - 1)   # after first conv
    L2 = L1 - 2                         # after second conv (== Th)
    assert L2 == Th, (L2, Th)

    def kernel(xe_ref, xo_ref, w1a_ref, b1a_ref, w2a_ref, b2a_ref,
               w1b_ref, b1b_ref, w2b_ref, b2b_ref, out_ref):

        def matmul(w, x3):
            # w: (M, K), x3: (bt, K, L) -> (bt, M, L); f32 accumulation on MXU.
            if bt == 1:
                return jnp.dot(w, x3[0],
                               preferred_element_type=jnp.float32)[None]
            wb = jnp.broadcast_to(w[None], (bt,) + w.shape)
            return jnp.einsum('bmk,bkl->bml', wb, x3,
                              preferred_element_type=jnp.float32)

        def rep_pad(z):
            # ReplicationPad1d((pad_l, pad_r)) on the time (lane) axis.
            left = jnp.broadcast_to(z[:, :, :1], (bt, Cp, pad_l))
            right = jnp.broadcast_to(z[:, :, Th - 1:Th], (bt, Cp, pad_r))
            return jnp.concatenate([left, z, right], axis=2)   # (bt, Cp, Lpad)

        def dual_branch(za, zb, w1_ref, b1_ref, w2_ref, b2_ref):
            # Two independent conv->LeakyReLU->(Dropout=id)->conv->tanh
            # branches evaluated with ONE block-diagonal matmul per conv.
            pa, pb = rep_pad(za), rep_pad(zb)
            xcol = jnp.concatenate(
                [pa[:, :, t:t + L1] for t in range(k)]
                + [pb[:, :, t:t + L1] for t in range(k)],
                axis=1)                                         # (bt, 2*k*Cp, L1)
            h = matmul(w1_ref[...], xcol) + b1_ref[...]
            h = jnp.where(h > 0.0, h, 0.01 * h)                 # LeakyReLU(0.01)
            hcol = jnp.concatenate(
                [h[:, :, t:t + L2] for t in range(3)], axis=1)  # (bt, 6*Hp, L2)
            y = jnp.tanh(matmul(w2_ref[...], hcol) + b2_ref[...])  # (bt, 2*Cp, Th)
            return y[:, :Cp, :], y[:, Cp:2 * Cp, :]

        xev = xe_ref[...]                                       # (bt, Cp, Th)
        xov = xo_ref[...]
        phi_e, psi_o = dual_branch(xev, xov, w1a_ref, b1a_ref, w2a_ref, b2a_ref)
        d = xov * jnp.exp(phi_e)            # x_odd  * exp(phi(x_even))
        c = xev * jnp.exp(psi_o)            # x_even * exp(psi(x_odd))
        u_d, p_c = dual_branch(d, c, w1b_ref, b1b_ref, w2b_ref, b2b_ref)
        out_ref[0] = c + u_d                # x_even_update -> child 2n
        out_ref[1] = d - p_c                # x_odd_update  -> child 2n+1

    act_spec = pl.BlockSpec((None, bt, Cp, Th), lambda n, b: (n, b, 0, 0))

    def w_spec(rows, cols):
        return pl.BlockSpec((None, rows, cols), lambda n, b: (n, 0, 0))

    return pl.pallas_call(
        kernel,
        grid=(N, B // bt),
        in_specs=[
            act_spec, act_spec,
            w_spec(Hp2, kCp2), w_spec(Hp2, 1), w_spec(Cp2, Hp6), w_spec(Cp2, 1),
            w_spec(Hp2, kCp2), w_spec(Hp2, 1), w_spec(Cp2, Hp6), w_spec(Cp2, 1),
        ],
        out_specs=pl.BlockSpec((None, 2, bt, Cp, Th),
                               lambda n, b: (n, 0, b, 0, 0)),
        out_shape=jax.ShapeDtypeStruct((N, 2, B, Cp, Th), jnp.float32),
        compiler_params=pltpu.CompilerParams(
            dimension_semantics=("parallel", "parallel"),
            vmem_limit_bytes=32 * 1024 * 1024),
    )(xe, xo, W1a, b1a, W2a, b2a, W1b, b1b, W2b, b2b)


# ------------------- tree glue (node-stacked, channel-major) -----------------


def scinet_tree_forward(x, packed_by_depth, level, *, b_tile=1):
    """x: (B, T, C) -> (B, T, C).  packed_by_depth[d] holds the 2^d nodes at
    depth d in order [root], [even, odd], [ee, eo, oe, oo], ... (packed)."""
    B, T, C = x.shape
    assert T % (2 ** (level + 1)) == 0, "T must be divisible by 2^(level+1)"
    Cp = packed_by_depth[0][2].shape[1] // 2          # from W2a: (N, 2*Cp, 6*Hp)

    xc = jnp.transpose(x, (0, 2, 1))                  # (B, C, T)
    if Cp > C:
        xc = jnp.pad(xc, ((0, 0), (0, Cp - C), (0, 0)))
    cur = xc[None]                                    # (1, B, Cp, T)

    for d in range(level + 1):
        xe = cur[..., 0::2]                           # (N, B, Cp, Th)
        xo = cur[..., 1::2]
        out = interactor_level_pallas(xe, xo, *packed_by_depth[d],
                                      b_tile=b_tile)  # (N, 2, B, Cp, Th)
        N = out.shape[0]
        Th = out.shape[-1]
        cur = out.reshape(2 * N, B, Cp, Th)           # free reshape: child 2n / 2n+1

    # One-shot zip_up_the_pants over the whole tree: final node index equals
    # the bit-reversed low (level+1) bits of the output time index.
    R = cur.shape[0]
    bits = level + 1
    perm = np.array(
        [int(format(i, '0{}b'.format(bits))[::-1], 2) for i in range(R)],
        dtype=np.int32)
    cur = jnp.take(cur, perm, axis=0)                 # (R, B, Cp, Tq)
    out = jnp.transpose(cur, (1, 3, 0, 2)).reshape(B, T, Cp)
    return out[:, :, :C]


# ------------- deterministic parameters (PyTorch conv layout + packing) ------


def init_torch_params_by_depth(key, level, C, H, k):
    """Per-depth stacked weights in PyTorch Conv1d layout.
    Branch order: 0=phi, 1=psi, 2=U, 3=P."""
    params = []
    for d in range(level + 1):
        N = 2 ** d
        key, k1, k2, k3, k4 = jax.random.split(key, 5)
        Wt1 = 0.1 * jax.random.normal(k1, (N, 4, H, C, k), jnp.float32)
        bt1 = 0.1 * jax.random.normal(k2, (N, 4, H), jnp.float32)
        Wt2 = 0.1 * jax.random.normal(k3, (N, 4, C, H, 3), jnp.float32)
        bt2 = 0.1 * jax.random.normal(k4, (N, 4, C), jnp.float32)
        params.append((Wt1, bt1, Wt2, bt2))
    return params


def pack_params(torch_params_by_depth):
    """Repack PyTorch Conv1d weights into per-depth block-diagonal im2col
    matrices for the (phi, psi) and (U, P) branch pairs, with channel / hidden
    dims zero-padded to multiples of 8 (sublane alignment)."""
    packed = []
    for Wt1, bt1, Wt2, bt2 in torch_params_by_depth:
        N, _, H, C, k = Wt1.shape
        Cp = _round_up(C, 8)
        Hp = _round_up(H, 8)

        def pack_pair(ia, ib, Wt1=Wt1, bt1=bt1, Wt2=Wt2, bt2=bt2,
                      N=N, H=H, C=C, k=k, Cp=Cp, Hp=Hp):
            # conv1: rows = output hidden, cols = (branch, tap, channel)
            W1 = jnp.zeros((N, 2 * Hp, 2, k, Cp), jnp.float32)
            W1 = W1.at[:, 0:H, 0, :, 0:C].set(
                jnp.transpose(Wt1[:, ia], (0, 1, 3, 2)))
            W1 = W1.at[:, Hp:Hp + H, 1, :, 0:C].set(
                jnp.transpose(Wt1[:, ib], (0, 1, 3, 2)))
            W1 = W1.reshape(N, 2 * Hp, 2 * k * Cp)
            b1 = jnp.zeros((N, 2 * Hp), jnp.float32)
            b1 = b1.at[:, 0:H].set(bt1[:, ia]).at[:, Hp:Hp + H].set(bt1[:, ib])
            # conv2: rows = output channel, cols = (tap, branch, hidden)
            W2 = jnp.zeros((N, 2 * Cp, 3, 2, Hp), jnp.float32)
            W2 = W2.at[:, 0:C, :, 0, 0:H].set(
                jnp.transpose(Wt2[:, ia], (0, 1, 3, 2)))
            W2 = W2.at[:, Cp:Cp + C, :, 1, 0:H].set(
                jnp.transpose(Wt2[:, ib], (0, 1, 3, 2)))
            W2 = W2.reshape(N, 2 * Cp, 6 * Hp)
            b2 = jnp.zeros((N, 2 * Cp), jnp.float32)
            b2 = b2.at[:, 0:C].set(bt2[:, ia]).at[:, Cp:Cp + C].set(bt2[:, ib])
            return (W1, b1[..., None], W2, b2[..., None])

        packed.append(pack_pair(0, 1) + pack_pair(2, 3))
    return packed


# ----------------------- pure-JAX reference (correctness) --------------------


def _ref_branch(x, Wt1, bt1, Wt2, bt2, pad_l, pad_r):
    # x: (B, C, L); Wt1: (H, C, k); bt1: (H,); Wt2: (C, H, 3); bt2: (C,)
    xp = jnp.concatenate(
        [jnp.repeat(x[:, :, :1], pad_l, axis=2), x,
         jnp.repeat(x[:, :, -1:], pad_r, axis=2)], axis=2)
    k = Wt1.shape[2]
    L1 = xp.shape[2] - (k - 1)
    acc = jnp.zeros((x.shape[0], Wt1.shape[0], L1), jnp.float32)
    for kk in range(k):
        acc = acc + jnp.einsum('hc,bcl->bhl', Wt1[:, :, kk], xp[:, :, kk:kk + L1])
    h = acc + bt1[None, :, None]
    h = jnp.where(h > 0, h, 0.01 * h)
    L2 = L1 - 2
    acc2 = jnp.zeros((x.shape[0], Wt2.shape[0], L2), jnp.float32)
    for kk in range(3):
        acc2 = acc2 + jnp.einsum('ch,bhl->bcl', Wt2[:, :, kk], h[:, :, kk:kk + L2])
    return jnp.tanh(acc2 + bt2[None, :, None])


def _ref_zip(even, odd):
    B, Le, C = even.shape
    return jnp.stack([even, odd], axis=2).reshape(B, 2 * Le, C)


def ref_tree_forward(x, torch_params_by_depth, level, pad_l, pad_r):
    nodes = [x]
    outs = None
    for d in range(level + 1):
        Wt1, bt1, Wt2, bt2 = torch_params_by_depth[d]
        nxt, leaf_outs = [], []
        for i, xn in enumerate(nodes):
            xe = jnp.transpose(xn[:, 0::2, :], (0, 2, 1))
            xo = jnp.transpose(xn[:, 1::2, :], (0, 2, 1))

            def br(z, j, i=i):
                return _ref_branch(z, Wt1[i, j], bt1[i, j], Wt2[i, j],
                                   bt2[i, j], pad_l, pad_r)

            dd = xo * jnp.exp(br(xe, 0))
            cc = xe * jnp.exp(br(xo, 1))
            eu = jnp.transpose(cc + br(dd, 2), (0, 2, 1))
            ou = jnp.transpose(dd - br(cc, 3), (0, 2, 1))
            if d < level:
                nxt.extend([eu, ou])
            else:
                leaf_outs.append(_ref_zip(eu, ou))
        nodes = nxt
        if d == level:
            outs = leaf_outs
    for _ in range(level):
        outs = [_ref_zip(outs[2 * i], outs[2 * i + 1])
                for i in range(len(outs) // 2)]
    return outs[0]


# ----------------------------------- main ------------------------------------


if __name__ == "__main__":
    # SCINet_Tree(in_planes=4, current_level=1, kernel_size=5, dropout=0.5,
    #             groups=1, hidden_size=2, INN=True) at small shapes.
    B, T, C = 2, 16, 4
    level = 1
    kernel_size = 5
    hidden_size = 2
    H = C * hidden_size
    pad_l, pad_r = _pad_amounts(kernel_size)

    key = jax.random.PRNGKey(0)
    k_x, k_p = jax.random.split(key)
    x = jax.random.normal(k_x, (B, T, C), jnp.float32)
    torch_params = init_torch_params_by_depth(k_p, level, C, H, kernel_size)
    packed_params = pack_params(torch_params)

    fwd = jax.jit(functools.partial(scinet_tree_forward, level=level, b_tile=1))
    out = fwd(x, packed_params)
    jax.block_until_ready(out)
    assert out.shape == (B, T, C), out.shape

    ref = ref_tree_forward(x, torch_params, level, pad_l, pad_r)
    err = float(jnp.max(jnp.abs(out - ref)))
    assert jnp.allclose(out, ref, atol=1e-4, rtol=1e-4), err

    print("KERNEL_OK")
</pallas_src>

<mosaic_0001>
module attributes {stable_mosaic.version = 11 : i64} {
  func.func @kernel(%arg0: i32, %arg1: i32, %arg2: memref<1x1x8x8xf32, #tpu.memory_space<vmem>>, %arg3: memref<1x1x8x8xf32, #tpu.memory_space<vmem>>, %arg4: memref<1x16x80xf32, #tpu.memory_space<vmem>>, %arg5: memref<1x16x1xf32, #tpu.memory_space<vmem>>, %arg6: memref<1x16x48xf32, #tpu.memory_space<vmem>>, %arg7: memref<1x16x1xf32, #tpu.memory_space<vmem>>, %arg8: memref<1x16x80xf32, #tpu.memory_space<vmem>>, %arg9: memref<1x16x1xf32, #tpu.memory_space<vmem>>, %arg10: memref<1x16x48xf32, #tpu.memory_space<vmem>>, %arg11: memref<1x16x1xf32, #tpu.memory_space<vmem>>, %arg12: memref<1x2x1x8x8xf32, #tpu.memory_space<vmem>>) attributes {dimension_semantics = [#tpu.dimension_semantics<parallel>, #tpu.dimension_semantics<parallel>], iteration_bounds = array<i64: 1, 2>, scalar_prefetch = 0 : i64, scratch_operands = 0 : i64, tpu.core_type = #tpu.core_type<tc>, window_params = [{transform_indices = @transform_0, window_bounds = array<i64: 1, 1, 8, 8>}, {transform_indices = @transform_1, window_bounds = array<i64: 1, 1, 8, 8>}, {transform_indices = @transform_2, window_bounds = array<i64: 1, 16, 80>}, {transform_indices = @transform_3, window_bounds = array<i64: 1, 16, 1>}, {transform_indices = @transform_4, window_bounds = array<i64: 1, 16, 48>}, {transform_indices = @transform_5, window_bounds = array<i64: 1, 16, 1>}, {transform_indices = @transform_6, window_bounds = array<i64: 1, 16, 80>}, {transform_indices = @transform_7, window_bounds = array<i64: 1, 16, 1>}, {transform_indices = @transform_8, window_bounds = array<i64: 1, 16, 48>}, {transform_indices = @transform_9, window_bounds = array<i64: 1, 16, 1>}, {transform_indices = @transform_10, window_bounds = array<i64: 1, 2, 1, 8, 8>}]} {
    %c0 = arith.constant 0 : index
    %c0_0 = arith.constant 0 : index
    %c0_1 = arith.constant 0 : index
    %c0_2 = arith.constant 0 : index
    %0 = vector.load %arg2[%c0, %c0_0, %c0_1, %c0_2] : memref<1x1x8x8xf32, #tpu.memory_space<vmem>>, vector<1x1x8x8xf32>
    %1 = vector.shape_cast %0 : vector<1x1x8x8xf32> to vector<1x8x8xf32>
    %c0_3 = arith.constant 0 : index
    %c0_4 = arith.constant 0 : index
    %c0_5 = arith.constant 0 : index
    %c0_6 = arith.constant 0 : index
    %2 = vector.load %arg3[%c0_3, %c0_4, %c0_5, %c0_6] : memref<1x1x8x8xf32, #tpu.memory_space<vmem>>, vector<1x1x8x8xf32>
    %3 = vector.shape_cast %2 : vector<1x1x8x8xf32> to vector<1x8x8xf32>
    %4 = vector.extract_strided_slice %1 {offsets = [0, 0, 0], sizes = [1, 8, 1], strides = [1, 1, 1]} : vector<1x8x8xf32> to vector<1x8x1xf32>
    %5 = vector.shape_cast %4 : vector<1x8x1xf32> to vector<1x8x1xf32>
    %6 = vector.broadcast %5 : vector<1x8x1xf32> to vector<1x8x3xf32>
    %7 = vector.extract_strided_slice %1 {offsets = [0, 0, 7], sizes = [1, 8, 1], strides = [1, 1, 1]} : vector<1x8x8xf32> to vector<1x8x1xf32>
    %8 = vector.shape_cast %7 : vector<1x8x1xf32> to vector<1x8x1xf32>
    %9 = vector.broadcast %8 : vector<1x8x1xf32> to vector<1x8x3xf32>
    %10 = tpu.concatenate %6, %1, %9 in 2 : vector<1x8x3xf32>, vector<1x8x8xf32>, vector<1x8x3xf32> -> vector<1x8x14xf32>
    %11 = vector.extract_strided_slice %3 {offsets = [0, 0, 0], sizes = [1, 8, 1], strides = [1, 1, 1]} : vector<1x8x8xf32> to vector<1x8x1xf32>
    %12 = vector.shape_cast %11 : vector<1x8x1xf32> to vector<1x8x1xf32>
    %13 = vector.broadcast %12 : vector<1x8x1xf32> to vector<1x8x3xf32>
    %14 = vector.extract_strided_slice %3 {offsets = [0, 0, 7], sizes = [1, 8, 1], strides = [1, 1, 1]} : vector<1x8x8xf32> to vector<1x8x1xf32>
    %15 = vector.shape_cast %14 : vector<1x8x1xf32> to vector<1x8x1xf32>
    %16 = vector.broadcast %15 : vector<1x8x1xf32> to vector<1x8x3xf32>
    %17 = tpu.concatenate %13, %3, %16 in 2 : vector<1x8x3xf32>, vector<1x8x8xf32>, vector<1x8x3xf32> -> vector<1x8x14xf32>
    %18 = vector.extract_strided_slice %10 {offsets = [0, 0, 0], sizes = [1, 8, 10], strides = [1, 1, 1]} : vector<1x8x14xf32> to vector<1x8x10xf32>
    %19 = vector.extract_strided_slice %10 {offsets = [0, 0, 1], sizes = [1, 8, 10], strides = [1, 1, 1]} : vector<1x8x14xf32> to vector<1x8x10xf32>
    %20 = vector.extract_strided_slice %10 {offsets = [0, 0, 2], sizes = [1, 8, 10], strides = [1, 1, 1]} : vector<1x8x14xf32> to vector<1x8x10xf32>
    %21 = vector.extract_strided_slice %10 {offsets = [0, 0, 3], sizes = [1, 8, 10], strides = [1, 1, 1]} : vector<1x8x14xf32> to vector<1x8x10xf32>
    %22 = vector.extract_strided_slice %10 {offsets = [0, 0, 4], sizes = [1, 8, 10], strides = [1, 1, 1]} : vector<1x8x14xf32> to vector<1x8x10xf32>
    %23 = vector.extract_strided_slice %17 {offsets = [0, 0, 0], sizes = [1, 8, 10], strides = [1, 1, 1]} : vector<1x8x14xf32> to vector<1x8x10xf32>
    %24 = vector.extract_strided_slice %17 {offsets = [0, 0, 1], sizes = [1, 8, 10], strides = [1, 1, 1]} : vector<1x8x14xf32> to vector<1x8x10xf32>
    %25 = vector.extract_strided_slice %17 {offsets = [0, 0, 2], sizes = [1, 8, 10], strides = [1, 1, 1]} : vector<1x8x14xf32> to vector<1x8x10xf32>
    %26 = vector.extract_strided_slice %17 {offsets = [0, 0, 3], sizes = [1, 8, 10], strides = [1, 1, 1]} : vector<1x8x14xf32> to vector<1x8x10xf32>
    %27 = vector.extract_strided_slice %17 {offsets = [0, 0, 4], sizes = [1, 8, 10], strides = [1, 1, 1]} : vector<1x8x14xf32> to vector<1x8x10xf32>
    %28 = tpu.concatenate %18, %19, %20, %21, %22, %23, %24, %25, %26, %27 in 1 : vector<1x8x10xf32>, vector<1x8x10xf32>, vector<1x8x10xf32>, vector<1x8x10xf32>, vector<1x8x10xf32>, vector<1x8x10xf32>, vector<1x8x10xf32>, vector<1x8x10xf32>, vector<1x8x10xf32>, vector<1x8x10xf32> -> vector<1x80x10xf32>
    %c0_7 = arith.constant 0 : index
    %c0_8 = arith.constant 0 : index
    %c0_9 = arith.constant 0 : index
    %29 = vector.load %arg4[%c0_7, %c0_8, %c0_9] : memref<1x16x80xf32, #tpu.memory_space<vmem>>, vector<1x16x80xf32>
    %30 = vector.shape_cast %29 : vector<1x16x80xf32> to vector<16x80xf32>
    %31 = vector.shape_cast %28 : vector<1x80x10xf32> to vector<80x10xf32>
    %cst = arith.constant dense<0.000000e+00> : vector<16x10xf32>
    %32 = tpu.matmul %30, %31, %cst {dimension_numbers = #tpu.dot_dimension_numbers<[1], [0], [0], [1], [0, 0, 1, 1], [], []>} : vector<16x80xf32>, vector<80x10xf32>, vector<16x10xf32> -> vector<16x10xf32>
    %33 = vector.shape_cast %32 : vector<16x10xf32> to vector<1x16x10xf32>
    %c0_10 = arith.constant 0 : index
    %c0_11 = arith.constant 0 : index
    %c0_12 = arith.constant 0 : index
    %34 = vector.load %arg5[%c0_10, %c0_11, %c0_12] : memref<1x16x1xf32, #tpu.memory_space<vmem>>, vector<1x16x1xf32>
    %35 = vector.shape_cast %34 : vector<1x16x1xf32> to vector<16x1xf32>
    %36 = vector.shape_cast %35 : vector<16x1xf32> to vector<1x16x1xf32>
    %37 = vector.broadcast %36 : vector<1x16x1xf32> to vector<1x16x10xf32>
    %38 = arith.addf %33, %37 : vector<1x16x10xf32>
    %cst_13 = arith.constant 0.000000e+00 : f32
    %39 = vector.broadcast %cst_13 : f32 to vector<1x16x10xf32>
    %40 = arith.cmpf ogt, %38, %39 : vector<1x16x10xf32>
    %cst_14 = arith.constant 0.00999999977 : f32
    %41 = vector.broadcast %cst_14 : f32 to vector<1x16x10xf32>
    %42 = arith.mulf %41, %38 : vector<1x16x10xf32>
    %43 = arith.select %40, %38, %42 : vector<1x16x10xi1>, vector<1x16x10xf32>
    %44 = vector.extract_strided_slice %43 {offsets = [0, 0, 0], sizes = [1, 16, 8], strides = [1, 1, 1]} : vector<1x16x10xf32> to vector<1x16x8xf32>
    %45 = vector.extract_strided_slice %43 {offsets = [0, 0, 1], sizes = [1, 16, 8], strides = [1, 1, 1]} : vector<1x16x10xf32> to vector<1x16x8xf32>
    %46 = vector.extract_strided_slice %43 {offsets = [0, 0, 2], sizes = [1, 16, 8], strides = [1, 1, 1]} : vector<1x16x10xf32> to vector<1x16x8xf32>
    %47 = tpu.concatenate %44, %45, %46 in 1 : vector<1x16x8xf32>, vector<1x16x8xf32>, vector<1x16x8xf32> -> vector<1x48x8xf32>
    %c0_15 = arith.constant 0 : index
    %c0_16 = arith.constant 0 : index
    %c0_17 = arith.constant 0 : index
    %48 = vector.load %arg6[%c0_15, %c0_16, %c0_17] : memref<1x16x48xf32, #tpu.memory_space<vmem>>, vector<1x16x48xf32>
    %49 = vector.shape_cast %48 : vector<1x16x48xf32> to vector<16x48xf32>
    %50 = vector.shape_cast %47 : vector<1x48x8xf32> to vector<48x8xf32>
    %cst_18 = arith.constant dense<0.000000e+00> : vector<16x8xf32>
    %51 = tpu.matmul %49, %50, %cst_18 {dimension_numbers = #tpu.dot_dimension_numbers<[1], [0], [0], [1], [0, 0, 1, 1], [], []>} : vector<16x48xf32>, vector<48x8xf32>, vector<16x8xf32> -> vector<16x8xf32>
    %52 = vector.shape_cast %51 : vector<16x8xf32> to vector<1x16x8xf32>
    %c0_19 = arith.constant 0 : index
    %c0_20 = arith.constant 0 : index
    %c0_21 = arith.constant 0 : index
    %53 = vector.load %arg7[%c0_19, %c0_20, %c0_21] : memref<1x16x1xf32, #tpu.memory_space<vmem>>, vector<1x16x1xf32>
    %54 = vector.shape_cast %53 : vector<1x16x1xf32> to vector<16x1xf32>
    %55 = vector.shape_cast %54 : vector<16x1xf32> to vector<1x16x1xf32>
    %56 = vector.broadcast %55 : vector<1x16x1xf32> to vector<1x16x8xf32>
    %57 = arith.addf %52, %56 : vector<1x16x8xf32>
    %58 = math.tanh %57 : vector<1x16x8xf32>
    %59 = vector.extract_strided_slice %58 {offsets = [0, 0, 0], sizes = [1, 8, 8], strides = [1, 1, 1]} : vector<1x16x8xf32> to vector<1x8x8xf32>
    %60 = vector.extract_strided_slice %58 {offsets = [0, 8, 0], sizes = [1, 8, 8], strides = [1, 1, 1]} : vector<1x16x8xf32> to vector<1x8x8xf32>
    %61 = math.exp %59 : vector<1x8x8xf32>
    %62 = arith.mulf %3, %61 : vector<1x8x8xf32>
    %63 = math.exp %60 : vector<1x8x8xf32>
    %64 = arith.mulf %1, %63 : vector<1x8x8xf32>
    %65 = vector.extract_strided_slice %62 {offsets = [0, 0, 0], sizes = [1, 8, 1], strides = [1, 1, 1]} : vector<1x8x8xf32> to vector<1x8x1xf32>
    %66 = vector.shape_cast %65 : vector<1x8x1xf32> to vector<1x8x1xf32>
    %67 = vector.broadcast %66 : vector<1x8x1xf32> to vector<1x8x3xf32>
    %68 = vector.extract_strided_slice %62 {offsets = [0, 0, 7], sizes = [1, 8, 1], strides = [1, 1, 1]} : vector<1x8x8xf32> to vector<1x8x1xf32>
    %69 = vector.shape_cast %68 : vector<1x8x1xf32> to vector<1x8x1xf32>
    %70 = vector.broadcast %69 : vector<1x8x1xf32> to vector<1x8x3xf32>
    %71 = tpu.concatenate %67, %62, %70 in 2 : vector<1x8x3xf32>, vector<1x8x8xf32>, vector<1x8x3xf32> -> vector<1x8x14xf32>
    %72 = vector.extract_strided_slice %64 {offsets = [0, 0, 0], sizes = [1, 8, 1], strides = [1, 1, 1]} : vector<1x8x8xf32> to vector<1x8x1xf32>
    %73 = vector.shape_cast %72 : vector<1x8x1xf32> to vector<1x8x1xf32>
    %74 = vector.broadcast %73 : vector<1x8x1xf32> to vector<1x8x3xf32>
    %75 = vector.extract_strided_slice %64 {offsets = [0, 0, 7], sizes = [1, 8, 1], strides = [1, 1, 1]} : vector<1x8x8xf32> to vector<1x8x1xf32>
    %76 = vector.shape_cast %75 : vector<1x8x1xf32> to vector<1x8x1xf32>
    %77 = vector.broadcast %76 : vector<1x8x1xf32> to vector<1x8x3xf32>
    %78 = tpu.concatenate %74, %64, %77 in 2 : vector<1x8x3xf32>, vector<1x8x8xf32>, vector<1x8x3xf32> -> vector<1x8x14xf32>
    %79 = vector.extract_strided_slice %71 {offsets = [0, 0, 0], sizes = [1, 8, 10], strides = [1, 1, 1]} : vector<1x8x14xf32> to vector<1x8x10xf32>
    %80 = vector.extract_strided_slice %71 {offsets = [0, 0, 1], sizes = [1, 8, 10], strides = [1, 1, 1]} : vector<1x8x14xf32> to vector<1x8x10xf32>
    %81 = vector.extract_strided_slice %71 {offsets = [0, 0, 2], sizes = [1, 8, 10], strides = [1, 1, 1]} : vector<1x8x14xf32> to vector<1x8x10xf32>
    %82 = vector.extract_strided_slice %71 {offsets = [0, 0, 3], sizes = [1, 8, 10], strides = [1, 1, 1]} : vector<1x8x14xf32> to vector<1x8x10xf32>
    %83 = vector.extract_strided_slice %71 {offsets = [0, 0, 4], sizes = [1, 8, 10], strides = [1, 1, 1]} : vector<1x8x14xf32> to vector<1x8x10xf32>
    %84 = vector.extract_strided_slice %78 {offsets = [0, 0, 0], sizes = [1, 8, 10], strides = [1, 1, 1]} : vector<1x8x14xf32> to vector<1x8x10xf32>
    %85 = vector.extract_strided_slice %78 {offsets = [0, 0, 1], sizes = [1, 8, 10], strides = [1, 1, 1]} : vector<1x8x14xf32> to vector<1x8x10xf32>
    %86 = vector.extract_strided_slice %78 {offsets = [0, 0, 2], sizes = [1, 8, 10], strides = [1, 1, 1]} : vector<1x8x14xf32> to vector<1x8x10xf32>
    %87 = vector.extract_strided_slice %78 {offsets = [0, 0, 3], sizes = [1, 8, 10], strides = [1, 1, 1]} : vector<1x8x14xf32> to vector<1x8x10xf32>
    %88 = vector.extract_strided_slice %78 {offsets = [0, 0, 4], sizes = [1, 8, 10], strides = [1, 1, 1]} : vector<1x8x14xf32> to vector<1x8x10xf32>
    %89 = tpu.concatenate %79, %80, %81, %82, %83, %84, %85, %86, %87, %88 in 1 : vector<1x8x10xf32>, vector<1x8x10xf32>, vector<1x8x10xf32>, vector<1x8x10xf32>, vector<1x8x10xf32>, vector<1x8x10xf32>, vector<1x8x10xf32>, vector<1x8x10xf32>, vector<1x8x10xf32>, vector<1x8x10xf32> -> vector<1x80x10xf32>
    %c0_22 = arith.constant 0 : index
    %c0_23 = arith.constant 0 : index
    %c0_24 = arith.constant 0 : index
    %90 = vector.load %arg8[%c0_22, %c0_23, %c0_24] : memref<1x16x80xf32, #tpu.memory_space<vmem>>, vector<1x16x80xf32>
    %91 = vector.shape_cast %90 : vector<1x16x80xf32> to vector<16x80xf32>
    %92 = vector.shape_cast %89 : vector<1x80x10xf32> to vector<80x10xf32>
    %cst_25 = arith.constant dense<0.000000e+00> : vector<16x10xf32>
    %93 = tpu.matmul %91, %92, %cst_25 {dimension_numbers = #tpu.dot_dimension_numbers<[1], [0], [0], [1], [0, 0, 1, 1], [], []>} : vector<16x80xf32>, vector<80x10xf32>, vector<16x10xf32> -> vector<16x10xf32>
    %94 = vector.shape_cast %93 : vector<16x10xf32> to vector<1x16x10xf32>
    %c0_26 = arith.constant 0 : index
    %c0_27 = arith.constant 0 : index
    %c0_28 = arith.constant 0 : index
    %95 = vector.load %arg9[%c0_26, %c0_27, %c0_28] : memref<1x16x1xf32, #tpu.memory_space<vmem>>, vector<1x16x1xf32>
    %96 = vector.shape_cast %95 : vector<1x16x1xf32> to vector<16x1xf32>
    %97 = vector.shape_cast %96 : vector<16x1xf32> to vector<1x16x1xf32>
    %98 = vector.broadcast %97 : vector<1x16x1xf32> to vector<1x16x10xf32>
    %99 = arith.addf %94, %98 : vector<1x16x10xf32>
    %cst_29 = arith.constant 0.000000e+00 : f32
    %100 = vector.broadcast %cst_29 : f32 to vector<1x16x10xf32>
    %101 = arith.cmpf ogt, %99, %100 : vector<1x16x10xf32>
    %cst_30 = arith.constant 0.00999999977 : f32
    %102 = vector.broadcast %cst_30 : f32 to vector<1x16x10xf32>
    %103 = arith.mulf %102, %99 : vector<1x16x10xf32>
    %104 = arith.select %101, %99, %103 : vector<1x16x10xi1>, vector<1x16x10xf32>
    %105 = vector.extract_strided_slice %104 {offsets = [0, 0, 0], sizes = [1, 16, 8], strides = [1, 1, 1]} : vector<1x16x10xf32> to vector<1x16x8xf32>
    %106 = vector.extract_strided_slice %104 {offsets = [0, 0, 1], sizes = [1, 16, 8], strides = [1, 1, 1]} : vector<1x16x10xf32> to vector<1x16x8xf32>
    %107 = vector.extract_strided_slice %104 {offsets = [0, 0, 2], sizes = [1, 16, 8], strides = [1, 1, 1]} : vector<1x16x10xf32> to vector<1x16x8xf32>
    %108 = tpu.concatenate %105, %106, %107 in 1 : vector<1x16x8xf32>, vector<1x16x8xf32>, vector<1x16x8xf32> -> vector<1x48x8xf32>
    %c0_31 = arith.constant 0 : index
    %c0_32 = arith.constant 0 : index
    %c0_33 = arith.constant 0 : index
    %109 = vector.load %arg10[%c0_31, %c0_32, %c0_33] : memref<1x16x48xf32, #tpu.memory_space<vmem>>, vector<1x16x48xf32>
    %110 = vector.shape_cast %109 : vector<1x16x48xf32> to vector<16x48xf32>
    %111 = vector.shape_cast %108 : vector<1x48x8xf32> to vector<48x8xf32>
    %cst_34 = arith.constant dense<0.000000e+00> : vector<16x8xf32>
    %112 = tpu.matmul %110, %111, %cst_34 {dimension_numbers = #tpu.dot_dimension_numbers<[1], [0], [0], [1], [0, 0, 1, 1], [], []>} : vector<16x48xf32>, vector<48x8xf32>, vector<16x8xf32> -> vector<16x8xf32>
    %113 = vector.shape_cast %112 : vector<16x8xf32> to vector<1x16x8xf32>
    %c0_35 = arith.constant 0 : index
    %c0_36 = arith.constant 0 : index
    %c0_37 = arith.constant 0 : index
    %114 = vector.load %arg11[%c0_35, %c0_36, %c0_37] : memref<1x16x1xf32, #tpu.memory_space<vmem>>, vector<1x16x1xf32>
    %115 = vector.shape_cast %114 : vector<1x16x1xf32> to vector<16x1xf32>
    %116 = vector.shape_cast %115 : vector<16x1xf32> to vector<1x16x1xf32>
    %117 = vector.broadcast %116 : vector<1x16x1xf32> to vector<1x16x8xf32>
    %118 = arith.addf %113, %117 : vector<1x16x8xf32>
    %119 = math.tanh %118 : vector<1x16x8xf32>
    %120 = vector.extract_strided_slice %119 {offsets = [0, 0, 0], sizes = [1, 8, 8], strides = [1, 1, 1]} : vector<1x16x8xf32> to vector<1x8x8xf32>
    %121 = vector.extract_strided_slice %119 {offsets = [0, 8, 0], sizes = [1, 8, 8], strides = [1, 1, 1]} : vector<1x16x8xf32> to vector<1x8x8xf32>
    %122 = arith.addf %64, %120 : vector<1x8x8xf32>
    %c0_38 = arith.constant 0 : index
    %c0_39 = arith.constant 0 : index
    %c0_40 = arith.constant 0 : index
    %c0_41 = arith.constant 0 : index
    %c0_42 = arith.constant 0 : index
    %123 = vector.load %arg12[%c0_38, %c0_39, %c0_40, %c0_41, %c0_42] : memref<1x2x1x8x8xf32, #tpu.memory_space<vmem>>, vector<1x1x1x8x8xf32>
    %124 = vector.shape_cast %123 : vector<1x1x1x8x8xf32> to vector<1x8x8xf32>
    %125 = vector.shape_cast %122 : vector<1x8x8xf32> to vector<1x1x1x8x8xf32>
    tpu.vector_store %arg12[%c0_38, %c0_39, %c0_40, %c0_41, %c0_42], %125 {strides = array<i32>} : memref<1x2x1x8x8xf32, #tpu.memory_space<vmem>>, vector<1x1x1x8x8xf32>,
    %126 = arith.subf %62, %121 : vector<1x8x8xf32>
    %c0_43 = arith.constant 0 : index
    %c1 = arith.constant 1 : index
    %c0_44 = arith.constant 0 : index
    %c0_45 = arith.constant 0 : index
    %c0_46 = arith.constant 0 : index
    %127 = vector.load %arg12[%c0_43, %c1, %c0_44, %c0_45, %c0_46] : memref<1x2x1x8x8xf32, #tpu.memory_space<vmem>>, vector<1x1x1x8x8xf32>
    %128 = vector.shape_cast %127 : vector<1x1x1x8x8xf32> to vector<1x8x8xf32>
    %129 = vector.shape_cast %126 : vector<1x8x8xf32> to vector<1x1x1x8x8xf32>
    tpu.vector_store %arg12[%c0_43, %c1, %c0_44, %c0_45, %c0_46], %129 {strides = array<i32>} : memref<1x2x1x8x8xf32, #tpu.memory_space<vmem>>, vector<1x1x1x8x8xf32>,
    return
  }
  func.func @transform_0(%arg0: i32, %arg1: i32) -> (i32, i32, i32, i32) {
    %c0_i32 = arith.constant 0 : i32
    %c0_i32_0 = arith.constant 0 : i32
    %c0_i32_1 = arith.constant 0 : i32
    return %arg0, %arg1, %c0_i32, %c0_i32_0 : i32, i32, i32, i32
  }
  func.func @transform_1(%arg0: i32, %arg1: i32) -> (i32, i32, i32, i32) {
    %c0_i32 = arith.constant 0 : i32
    %c0_i32_0 = arith.constant 0 : i32
    %c0_i32_1 = arith.constant 0 : i32
    return %arg0, %arg1, %c0_i32, %c0_i32_0 : i32, i32, i32, i32
  }
  func.func @transform_2(%arg0: i32, %arg1: i32) -> (i32, i32, i32) {
    %c0_i32 = arith.constant 0 : i32
    %c0_i32_0 = arith.constant 0 : i32
    %c0_i32_1 = arith.constant 0 : i32
    return %arg0, %c0_i32, %c0_i32_0 : i32, i32, i32
  }
  func.func @transform_3(%arg0: i32, %arg1: i32) -> (i32, i32, i32) {
    %c0_i32 = arith.constant 0 : i32
    %c0_i32_0 = arith.constant 0 : i32
    %c0_i32_1 = arith.constant 0 : i32
    return %arg0, %c0_i32, %c0_i32_0 : i32, i32, i32
  }
  func.func @transform_4(%arg0: i32, %arg1: i32) -> (i32, i32, i32) {
    %c0_i32 = arith.constant 0 : i32
    %c0_i32_0 = arith.constant 0 : i32
    %c0_i32_1 = arith.constant 0 : i32
    return %arg0, %c0_i32, %c0_i32_0 : i32, i32, i32
  }
  func.func @transform_5(%arg0: i32, %arg1: i32) -> (i32, i32, i32) {
    %c0_i32 = arith.constant 0 : i32
    %c0_i32_0 = arith.constant 0 : i32
    %c0_i32_1 = arith.constant 0 : i32
    return %arg0, %c0_i32, %c0_i32_0 : i32, i32, i32
  }
  func.func @transform_6(%arg0: i32, %arg1: i32) -> (i32, i32, i32) {
    %c0_i32 = arith.constant 0 : i32
    %c0_i32_0 = arith.constant 0 : i32
    %c0_i32_1 = arith.constant 0 : i32
    return %arg0, %c0_i32, %c0_i32_0 : i32, i32, i32
  }
  func.func @transform_7(%arg0: i32, %arg1: i32) -> (i32, i32, i32) {
    %c0_i32 = arith.constant 0 : i32
    %c0_i32_0 = arith.constant 0 : i32
    %c0_i32_1 = arith.constant 0 : i32
    return %arg0, %c0_i32, %c0_i32_0 : i32, i32, i32
  }
  func.func @transform_8(%arg0: i32, %arg1: i32) -> (i32, i32, i32) {
    %c0_i32 = arith.constant 0 : i32
    %c0_i32_0 = arith.constant 0 : i32
    %c0_i32_1 = arith.constant 0 : i32
    return %arg0, %c0_i32, %c0_i32_0 : i32, i32, i32
  }
  func.func @transform_9(%arg0: i32, %arg1: i32) -> (i32, i32, i32) {
    %c0_i32 = arith.constant 0 : i32
    %c0_i32_0 = arith.constant 0 : i32
    %c0_i32_1 = arith.constant 0 : i32
    return %arg0, %c0_i32, %c0_i32_0 : i32, i32, i32
  }
  func.func @transform_10(%arg0: i32, %arg1: i32) -> (i32, i32, i32, i32, i32) {
    %c0_i32 = arith.constant 0 : i32
    %c0_i32_0 = arith.constant 0 : i32
    %c0_i32_1 = arith.constant 0 : i32
    %c0_i32_2 = arith.constant 0 : i32
    return %arg0, %c0_i32, %arg1, %c0_i32_0, %c0_i32_1 : i32, i32, i32, i32, i32
  }
}

module attributes {stable_mosaic.version = 11 : i64} {
  func.func @kernel(%arg0: i32, %arg1: i32, %arg2: memref<1x1x8x4xf32, #tpu.memory_space<vmem>>, %arg3: memref<1x1x8x4xf32, #tpu.memory_space<vmem>>, %arg4: memref<1x16x80xf32, #tpu.memory_space<vmem>>, %arg5: memref<1x16x1xf32, #tpu.memory_space<vmem>>, %arg6: memref<1x16x48xf32, #tpu.memory_space<vmem>>, %arg7: memref<1x16x1xf32, #tpu.memory_space<vmem>>, %arg8: memref<1x16x80xf32, #tpu.memory_space<vmem>>, %arg9: memref<1x16x1xf32, #tpu.memory_space<vmem>>, %arg10: memref<1x16x48xf32, #tpu.memory_space<vmem>>, %arg11: memref<1x16x1xf32, #tpu.memory_space<vmem>>, %arg12: memref<1x2x1x8x4xf32, #tpu.memory_space<vmem>>) attributes {dimension_semantics = [#tpu.dimension_semantics<parallel>, #tpu.dimension_semantics<parallel>], iteration_bounds = array<i64: 2, 2>, scalar_prefetch = 0 : i64, scratch_operands = 0 : i64, tpu.core_type = #tpu.core_type<tc>, window_params = [{transform_indices = @transform_0, window_bounds = array<i64: 1, 1, 8, 4>}, {transform_indices = @transform_1, window_bounds = array<i64: 1, 1, 8, 4>}, {transform_indices = @transform_2, window_bounds = array<i64: 1, 16, 80>}, {transform_indices = @transform_3, window_bounds = array<i64: 1, 16, 1>}, {transform_indices = @transform_4, window_bounds = array<i64: 1, 16, 48>}, {transform_indices = @transform_5, window_bounds = array<i64: 1, 16, 1>}, {transform_indices = @transform_6, window_bounds = array<i64: 1, 16, 80>}, {transform_indices = @transform_7, window_bounds = array<i64: 1, 16, 1>}, {transform_indices = @transform_8, window_bounds = array<i64: 1, 16, 48>}, {transform_indices = @transform_9, window_bounds = array<i64: 1, 16, 1>}, {transform_indices = @transform_10, window_bounds = array<i64: 1, 2, 1, 8, 4>}]} {
    %c0 = arith.constant 0 : index
    %c0_0 = arith.constant 0 : index
    %c0_1 = arith.constant 0 : index
    %c0_2 = arith.constant 0 : index
    %0 = vector.load %arg2[%c0, %c0_0, %c0_1, %c0_2] : memref<1x1x8x4xf32, #tpu.memory_space<vmem>>, vector<1x1x8x4xf32>
    %1 = vector.shape_cast %0 : vector<1x1x8x4xf32> to vector<1x8x4xf32>
    %c0_3 = arith.constant 0 : index
    %c0_4 = arith.constant 0 : index
    %c0_5 = arith.constant 0 : index
    %c0_6 = arith.constant 0 : index
    %2 = vector.load %arg3[%c0_3, %c0_4, %c0_5, %c0_6] : memref<1x1x8x4xf32, #tpu.memory_space<vmem>>, vector<1x1x8x4xf32>
    %3 = vector.shape_cast %2 : vector<1x1x8x4xf32> to vector<1x8x4xf32>
    %4 = vector.extract_strided_slice %1 {offsets = [0, 0, 0], sizes = [1, 8, 1], strides = [1, 1, 1]} : vector<1x8x4xf32> to vector<1x8x1xf32>
    %5 = vector.shape_cast %4 : vector<1x8x1xf32> to vector<1x8x1xf32>
    %6 = vector.broadcast %5 : vector<1x8x1xf32> to vector<1x8x3xf32>
    %7 = vector.extract_strided_slice %1 {offsets = [0, 0, 3], sizes = [1, 8, 1], strides = [1, 1, 1]} : vector<1x8x4xf32> to vector<1x8x1xf32>
    %8 = vector.shape_cast %7 : vector<1x8x1xf32> to vector<1x8x1xf32>
    %9 = vector.broadcast %8 : vector<1x8x1xf32> to vector<1x8x3xf32>
    %10 = tpu.concatenate %6, %1, %9 in 2 : vector<1x8x3xf32>, vector<1x8x4xf32>, vector<1x8x3xf32> -> vector<1x8x10xf32>
    %11 = vector.extract_strided_slice %3 {offsets = [0, 0, 0], sizes = [1, 8, 1], strides = [1, 1, 1]} : vector<1x8x4xf32> to vector<1x8x1xf32>
    %12 = vector.shape_cast %11 : vector<1x8x1xf32> to vector<1x8x1xf32>
    %13 = vector.broadcast %12 : vector<1x8x1xf32> to vector<1x8x3xf32>
    %14 = vector.extract_strided_slice %3 {offsets = [0, 0, 3], sizes = [1, 8, 1], strides = [1, 1, 1]} : vector<1x8x4xf32> to vector<1x8x1xf32>
    %15 = vector.shape_cast %14 : vector<1x8x1xf32> to vector<1x8x1xf32>
    %16 = vector.broadcast %15 : vector<1x8x1xf32> to vector<1x8x3xf32>
    %17 = tpu.concatenate %13, %3, %16 in 2 : vector<1x8x3xf32>, vector<1x8x4xf32>, vector<1x8x3xf32> -> vector<1x8x10xf32>
    %18 = vector.extract_strided_slice %10 {offsets = [0, 0, 0], sizes = [1, 8, 6], strides = [1, 1, 1]} : vector<1x8x10xf32> to vector<1x8x6xf32>
    %19 = vector.extract_strided_slice %10 {offsets = [0, 0, 1], sizes = [1, 8, 6], strides = [1, 1, 1]} : vector<1x8x10xf32> to vector<1x8x6xf32>
    %20 = vector.extract_strided_slice %10 {offsets = [0, 0, 2], sizes = [1, 8, 6], strides = [1, 1, 1]} : vector<1x8x10xf32> to vector<1x8x6xf32>
    %21 = vector.extract_strided_slice %10 {offsets = [0, 0, 3], sizes = [1, 8, 6], strides = [1, 1, 1]} : vector<1x8x10xf32> to vector<1x8x6xf32>
    %22 = vector.extract_strided_slice %10 {offsets = [0, 0, 4], sizes = [1, 8, 6], strides = [1, 1, 1]} : vector<1x8x10xf32> to vector<1x8x6xf32>
    %23 = vector.extract_strided_slice %17 {offsets = [0, 0, 0], sizes = [1, 8, 6], strides = [1, 1, 1]} : vector<1x8x10xf32> to vector<1x8x6xf32>
    %24 = vector.extract_strided_slice %17 {offsets = [0, 0, 1], sizes = [1, 8, 6], strides = [1, 1, 1]} : vector<1x8x10xf32> to vector<1x8x6xf32>
    %25 = vector.extract_strided_slice %17 {offsets = [0, 0, 2], sizes = [1, 8, 6], strides = [1, 1, 1]} : vector<1x8x10xf32> to vector<1x8x6xf32>
    %26 = vector.extract_strided_slice %17 {offsets = [0, 0, 3], sizes = [1, 8, 6], strides = [1, 1, 1]} : vector<1x8x10xf32> to vector<1x8x6xf32>
    %27 = vector.extract_strided_slice %17 {offsets = [0, 0, 4], sizes = [1, 8, 6], strides = [1, 1, 1]} : vector<1x8x10xf32> to vector<1x8x6xf32>
    %28 = tpu.concatenate %18, %19, %20, %21, %22, %23, %24, %25, %26, %27 in 1 : vector<1x8x6xf32>, vector<1x8x6xf32>, vector<1x8x6xf32>, vector<1x8x6xf32>, vector<1x8x6xf32>, vector<1x8x6xf32>, vector<1x8x6xf32>, vector<1x8x6xf32>, vector<1x8x6xf32>, vector<1x8x6xf32> -> vector<1x80x6xf32>
    %c0_7 = arith.constant 0 : index
    %c0_8 = arith.constant 0 : index
    %c0_9 = arith.constant 0 : index
    %29 = vector.load %arg4[%c0_7, %c0_8, %c0_9] : memref<1x16x80xf32, #tpu.memory_space<vmem>>, vector<1x16x80xf32>
    %30 = vector.shape_cast %29 : vector<1x16x80xf32> to vector<16x80xf32>
    %31 = vector.shape_cast %28 : vector<1x80x6xf32> to vector<80x6xf32>
    %cst = arith.constant dense<0.000000e+00> : vector<16x6xf32>
    %32 = tpu.matmul %30, %31, %cst {dimension_numbers = #tpu.dot_dimension_numbers<[1], [0], [0], [1], [0, 0, 1, 1], [], []>} : vector<16x80xf32>, vector<80x6xf32>, vector<16x6xf32> -> vector<16x6xf32>
    %33 = vector.shape_cast %32 : vector<16x6xf32> to vector<1x16x6xf32>
    %c0_10 = arith.constant 0 : index
    %c0_11 = arith.constant 0 : index
    %c0_12 = arith.constant 0 : index
    %34 = vector.load %arg5[%c0_10, %c0_11, %c0_12] : memref<1x16x1xf32, #tpu.memory_space<vmem>>, vector<1x16x1xf32>
    %35 = vector.shape_cast %34 : vector<1x16x1xf32> to vector<16x1xf32>
    %36 = vector.shape_cast %35 : vector<16x1xf32> to vector<1x16x1xf32>
    %37 = vector.broadcast %36 : vector<1x16x1xf32> to vector<1x16x6xf32>
    %38 = arith.addf %33, %37 : vector<1x16x6xf32>
    %cst_13 = arith.constant 0.000000e+00 : f32
    %39 = vector.broadcast %cst_13 : f32 to vector<1x16x6xf32>
    %40 = arith.cmpf ogt, %38, %39 : vector<1x16x6xf32>
    %cst_14 = arith.constant 0.00999999977 : f32
    %41 = vector.broadcast %cst_14 : f32 to vector<1x16x6xf32>
    %42 = arith.mulf %41, %38 : vector<1x16x6xf32>
    %43 = arith.select %40, %38, %42 : vector<1x16x6xi1>, vector<1x16x6xf32>
    %44 = vector.extract_strided_slice %43 {offsets = [0, 0, 0], sizes = [1, 16, 4], strides = [1, 1, 1]} : vector<1x16x6xf32> to vector<1x16x4xf32>
    %45 = vector.extract_strided_slice %43 {offsets = [0, 0, 1], sizes = [1, 16, 4], strides = [1, 1, 1]} : vector<1x16x6xf32> to vector<1x16x4xf32>
    %46 = vector.extract_strided_slice %43 {offsets = [0, 0, 2], sizes = [1, 16, 4], strides = [1, 1, 1]} : vector<1x16x6xf32> to vector<1x16x4xf32>
    %47 = tpu.concatenate %44, %45, %46 in 1 : vector<1x16x4xf32>, vector<1x16x4xf32>, vector<1x16x4xf32> -> vector<1x48x4xf32>
    %c0_15 = arith.constant 0 : index
    %c0_16 = arith.constant 0 : index
    %c0_17 = arith.constant 0 : index
    %48 = vector.load %arg6[%c0_15, %c0_16, %c0_17] : memref<1x16x48xf32, #tpu.memory_space<vmem>>, vector<1x16x48xf32>
    %49 = vector.shape_cast %48 : vector<1x16x48xf32> to vector<16x48xf32>
    %50 = vector.shape_cast %47 : vector<1x48x4xf32> to vector<48x4xf32>
    %cst_18 = arith.constant dense<0.000000e+00> : vector<16x4xf32>
    %51 = tpu.matmul %49, %50, %cst_18 {dimension_numbers = #tpu.dot_dimension_numbers<[1], [0], [0], [1], [0, 0, 1, 1], [], []>} : vector<16x48xf32>, vector<48x4xf32>, vector<16x4xf32> -> vector<16x4xf32>
    %52 = vector.shape_cast %51 : vector<16x4xf32> to vector<1x16x4xf32>
    %c0_19 = arith.constant 0 : index
    %c0_20 = arith.constant 0 : index
    %c0_21 = arith.constant 0 : index
    %53 = vector.load %arg7[%c0_19, %c0_20, %c0_21] : memref<1x16x1xf32, #tpu.memory_space<vmem>>, vector<1x16x1xf32>
    %54 = vector.shape_cast %53 : vector<1x16x1xf32> to vector<16x1xf32>
    %55 = vector.shape_cast %54 : vector<16x1xf32> to vector<1x16x1xf32>
    %56 = vector.broadcast %55 : vector<1x16x1xf32> to vector<1x16x4xf32>
    %57 = arith.addf %52, %56 : vector<1x16x4xf32>
    %58 = math.tanh %57 : vector<1x16x4xf32>
    %59 = vector.extract_strided_slice %58 {offsets = [0, 0, 0], sizes = [1, 8, 4], strides = [1, 1, 1]} : vector<1x16x4xf32> to vector<1x8x4xf32>
    %60 = vector.extract_strided_slice %58 {offsets = [0, 8, 0], sizes = [1, 8, 4], strides = [1, 1, 1]} : vector<1x16x4xf32> to vector<1x8x4xf32>
    %61 = math.exp %59 : vector<1x8x4xf32>
    %62 = arith.mulf %3, %61 : vector<1x8x4xf32>
    %63 = math.exp %60 : vector<1x8x4xf32>
    %64 = arith.mulf %1, %63 : vector<1x8x4xf32>
    %65 = vector.extract_strided_slice %62 {offsets = [0, 0, 0], sizes = [1, 8, 1], strides = [1, 1, 1]} : vector<1x8x4xf32> to vector<1x8x1xf32>
    %66 = vector.shape_cast %65 : vector<1x8x1xf32> to vector<1x8x1xf32>
    %67 = vector.broadcast %66 : vector<1x8x1xf32> to vector<1x8x3xf32>
    %68 = vector.extract_strided_slice %62 {offsets = [0, 0, 3], sizes = [1, 8, 1], strides = [1, 1, 1]} : vector<1x8x4xf32> to vector<1x8x1xf32>
    %69 = vector.shape_cast %68 : vector<1x8x1xf32> to vector<1x8x1xf32>
    %70 = vector.broadcast %69 : vector<1x8x1xf32> to vector<1x8x3xf32>
    %71 = tpu.concatenate %67, %62, %70 in 2 : vector<1x8x3xf32>, vector<1x8x4xf32>, vector<1x8x3xf32> -> vector<1x8x10xf32>
    %72 = vector.extract_strided_slice %64 {offsets = [0, 0, 0], sizes = [1, 8, 1], strides = [1, 1, 1]} : vector<1x8x4xf32> to vector<1x8x1xf32>
    %73 = vector.shape_cast %72 : vector<1x8x1xf32> to vector<1x8x1xf32>
    %74 = vector.broadcast %73 : vector<1x8x1xf32> to vector<1x8x3xf32>
    %75 = vector.extract_strided_slice %64 {offsets = [0, 0, 3], sizes = [1, 8, 1], strides = [1, 1, 1]} : vector<1x8x4xf32> to vector<1x8x1xf32>
    %76 = vector.shape_cast %75 : vector<1x8x1xf32> to vector<1x8x1xf32>
    %77 = vector.broadcast %76 : vector<1x8x1xf32> to vector<1x8x3xf32>
    %78 = tpu.concatenate %74, %64, %77 in 2 : vector<1x8x3xf32>, vector<1x8x4xf32>, vector<1x8x3xf32> -> vector<1x8x10xf32>
    %79 = vector.extract_strided_slice %71 {offsets = [0, 0, 0], sizes = [1, 8, 6], strides = [1, 1, 1]} : vector<1x8x10xf32> to vector<1x8x6xf32>
    %80 = vector.extract_strided_slice %71 {offsets = [0, 0, 1], sizes = [1, 8, 6], strides = [1, 1, 1]} : vector<1x8x10xf32> to vector<1x8x6xf32>
    %81 = vector.extract_strided_slice %71 {offsets = [0, 0, 2], sizes = [1, 8, 6], strides = [1, 1, 1]} : vector<1x8x10xf32> to vector<1x8x6xf32>
    %82 = vector.extract_strided_slice %71 {offsets = [0, 0, 3], sizes = [1, 8, 6], strides = [1, 1, 1]} : vector<1x8x10xf32> to vector<1x8x6xf32>
    %83 = vector.extract_strided_slice %71 {offsets = [0, 0, 4], sizes = [1, 8, 6], strides = [1, 1, 1]} : vector<1x8x10xf32> to vector<1x8x6xf32>
    %84 = vector.extract_strided_slice %78 {offsets = [0, 0, 0], sizes = [1, 8, 6], strides = [1, 1, 1]} : vector<1x8x10xf32> to vector<1x8x6xf32>
    %85 = vector.extract_strided_slice %78 {offsets = [0, 0, 1], sizes = [1, 8, 6], strides = [1, 1, 1]} : vector<1x8x10xf32> to vector<1x8x6xf32>
    %86 = vector.extract_strided_slice %78 {offsets = [0, 0, 2], sizes = [1, 8, 6], strides = [1, 1, 1]} : vector<1x8x10xf32> to vector<1x8x6xf32>
    %87 = vector.extract_strided_slice %78 {offsets = [0, 0, 3], sizes = [1, 8, 6], strides = [1, 1, 1]} : vector<1x8x10xf32> to vector<1x8x6xf32>
    %88 = vector.extract_strided_slice %78 {offsets = [0, 0, 4], sizes = [1, 8, 6], strides = [1, 1, 1]} : vector<1x8x10xf32> to vector<1x8x6xf32>
    %89 = tpu.concatenate %79, %80, %81, %82, %83, %84, %85, %86, %87, %88 in 1 : vector<1x8x6xf32>, vector<1x8x6xf32>, vector<1x8x6xf32>, vector<1x8x6xf32>, vector<1x8x6xf32>, vector<1x8x6xf32>, vector<1x8x6xf32>, vector<1x8x6xf32>, vector<1x8x6xf32>, vector<1x8x6xf32> -> vector<1x80x6xf32>
    %c0_22 = arith.constant 0 : index
    %c0_23 = arith.constant 0 : index
    %c0_24 = arith.constant 0 : index
    %90 = vector.load %arg8[%c0_22, %c0_23, %c0_24] : memref<1x16x80xf32, #tpu.memory_space<vmem>>, vector<1x16x80xf32>
    %91 = vector.shape_cast %90 : vector<1x16x80xf32> to vector<16x80xf32>
    %92 = vector.shape_cast %89 : vector<1x80x6xf32> to vector<80x6xf32>
    %cst_25 = arith.constant dense<0.000000e+00> : vector<16x6xf32>
    %93 = tpu.matmul %91, %92, %cst_25 {dimension_numbers = #tpu.dot_dimension_numbers<[1], [0], [0], [1], [0, 0, 1, 1], [], []>} : vector<16x80xf32>, vector<80x6xf32>, vector<16x6xf32> -> vector<16x6xf32>
    %94 = vector.shape_cast %93 : vector<16x6xf32> to vector<1x16x6xf32>
    %c0_26 = arith.constant 0 : index
    %c0_27 = arith.constant 0 : index
    %c0_28 = arith.constant 0 : index
    %95 = vector.load %arg9[%c0_26, %c0_27, %c0_28] : memref<1x16x1xf32, #tpu.memory_space<vmem>>, vector<1x16x1xf32>
    %96 = vector.shape_cast %95 : vector<1x16x1xf32> to vector<16x1xf32>
    %97 = vector.shape_cast %96 : vector<16x1xf32> to vector<1x16x1xf32>
    %98 = vector.broadcast %97 : vector<1x16x1xf32> to vector<1x16x6xf32>
    %99 = arith.addf %94, %98 : vector<1x16x6xf32>
    %cst_29 = arith.constant 0.000000e+00 : f32
    %100 = vector.broadcast %cst_29 : f32 to vector<1x16x6xf32>
    %101 = arith.cmpf ogt, %99, %100 : vector<1x16x6xf32>
    %cst_30 = arith.constant 0.00999999977 : f32
    %102 = vector.broadcast %cst_30 : f32 to vector<1x16x6xf32>
    %103 = arith.mulf %102, %99 : vector<1x16x6xf32>
    %104 = arith.select %101, %99, %103 : vector<1x16x6xi1>, vector<1x16x6xf32>
    %105 = vector.extract_strided_slice %104 {offsets = [0, 0, 0], sizes = [1, 16, 4], strides = [1, 1, 1]} : vector<1x16x6xf32> to vector<1x16x4xf32>
    %106 = vector.extract_strided_slice %104 {offsets = [0, 0, 1], sizes = [1, 16, 4], strides = [1, 1, 1]} : vector<1x16x6xf32> to vector<1x16x4xf32>
    %107 = vector.extract_strided_slice %104 {offsets = [0, 0, 2], sizes = [1, 16, 4], strides = [1, 1, 1]} : vector<1x16x6xf32> to vector<1x16x4xf32>
    %108 = tpu.concatenate %105, %106, %107 in 1 : vector<1x16x4xf32>, vector<1x16x4xf32>, vector<1x16x4xf32> -> vector<1x48x4xf32>
    %c0_31 = arith.constant 0 : index
    %c0_32 = arith.constant 0 : index
    %c0_33 = arith.constant 0 : index
    %109 = vector.load %arg10[%c0_31, %c0_32, %c0_33] : memref<1x16x48xf32, #tpu.memory_space<vmem>>, vector<1x16x48xf32>
    %110 = vector.shape_cast %109 : vector<1x16x48xf32> to vector<16x48xf32>
    %111 = vector.shape_cast %108 : vector<1x48x4xf32> to vector<48x4xf32>
    %cst_34 = arith.constant dense<0.000000e+00> : vector<16x4xf32>
    %112 = tpu.matmul %110, %111, %cst_34 {dimension_numbers = #tpu.dot_dimension_numbers<[1], [0], [0], [1], [0, 0, 1, 1], [], []>} : vector<16x48xf32>, vector<48x4xf32>, vector<16x4xf32> -> vector<16x4xf32>
    %113 = vector.shape_cast %112 : vector<16x4xf32> to vector<1x16x4xf32>
    %c0_35 = arith.constant 0 : index
    %c0_36 = arith.constant 0 : index
    %c0_37 = arith.constant 0 : index
    %114 = vector.load %arg11[%c0_35, %c0_36, %c0_37] : memref<1x16x1xf32, #tpu.memory_space<vmem>>, vector<1x16x1xf32>
    %115 = vector.shape_cast %114 : vector<1x16x1xf32> to vector<16x1xf32>
    %116 = vector.shape_cast %115 : vector<16x1xf32> to vector<1x16x1xf32>
    %117 = vector.broadcast %116 : vector<1x16x1xf32> to vector<1x16x4xf32>
    %118 = arith.addf %113, %117 : vector<1x16x4xf32>
    %119 = math.tanh %118 : vector<1x16x4xf32>
    %120 = vector.extract_strided_slice %119 {offsets = [0, 0, 0], sizes = [1, 8, 4], strides = [1, 1, 1]} : vector<1x16x4xf32> to vector<1x8x4xf32>
    %121 = vector.extract_strided_slice %119 {offsets = [0, 8, 0], sizes = [1, 8, 4], strides = [1, 1, 1]} : vector<1x16x4xf32> to vector<1x8x4xf32>
    %122 = arith.addf %64, %120 : vector<1x8x4xf32>
    %c0_38 = arith.constant 0 : index
    %c0_39 = arith.constant 0 : index
    %c0_40 = arith.constant 0 : index
    %c0_41 = arith.constant 0 : index
    %c0_42 = arith.constant 0 : index
    %123 = vector.load %arg12[%c0_38, %c0_39, %c0_40, %c0_41, %c0_42] : memref<1x2x1x8x4xf32, #tpu.memory_space<vmem>>, vector<1x1x1x8x4xf32>
    %124 = vector.shape_cast %123 : vector<1x1x1x8x4xf32> to vector<1x8x4xf32>
    %125 = vector.shape_cast %122 : vector<1x8x4xf32> to vector<1x1x1x8x4xf32>
    tpu.vector_store %arg12[%c0_38, %c0_39, %c0_40, %c0_41, %c0_42], %125 {strides = array<i32>} : memref<1x2x1x8x4xf32, #tpu.memory_space<vmem>>, vector<1x1x1x8x4xf32>,
    %126 = arith.subf %62, %121 : vector<1x8x4xf32>
    %c0_43 = arith.constant 0 : index
    %c1 = arith.constant 1 : index
    %c0_44 = arith.constant 0 : index
    %c0_45 = arith.constant 0 : index
    %c0_46 = arith.constant 0 : index
    %127 = vector.load %arg12[%c0_43, %c1, %c0_44, %c0_45, %c0_46] : memref<1x2x1x8x4xf32, #tpu.memory_space<vmem>>, vector<1x1x1x8x4xf32>
    %128 = vector.shape_cast %127 : vector<1x1x1x8x4xf32> to vector<1x8x4xf32>
    %129 = vector.shape_cast %126 : vector<1x8x4xf32> to vector<1x1x1x8x4xf32>
    tpu.vector_store %arg12[%c0_43, %c1, %c0_44, %c0_45, %c0_46], %129 {strides = array<i32>} : memref<1x2x1x8x4xf32, #tpu.memory_space<vmem>>, vector<1x1x1x8x4xf32>,
    return
  }
  func.func @transform_0(%arg0: i32, %arg1: i32) -> (i32, i32, i32, i32) {
    %c0_i32 = arith.constant 0 : i32
    %c0_i32_0 = arith.constant 0 : i32
    %c0_i32_1 = arith.constant 0 : i32
    return %arg0, %arg1, %c0_i32, %c0_i32_0 : i32, i32, i32, i32
  }
  func.func @transform_1(%arg0: i32, %arg1: i32) -> (i32, i32, i32, i32) {
    %c0_i32 = arith.constant 0 : i32
    %c0_i32_0 = arith.constant 0 : i32
    %c0_i32_1 = arith.constant 0 : i32
    return %arg0, %arg1, %c0_i32, %c0_i32_0 : i32, i32, i32, i32
  }
  func.func @transform_2(%arg0: i32, %arg1: i32) -> (i32, i32, i32) {
    %c0_i32 = arith.constant 0 : i32
    %c0_i32_0 = arith.constant 0 : i32
    %c0_i32_1 = arith.constant 0 : i32
    return %arg0, %c0_i32, %c0_i32_0 : i32, i32, i32
  }
  func.func @transform_3(%arg0: i32, %arg1: i32) -> (i32, i32, i32) {
    %c0_i32 = arith.constant 0 : i32
    %c0_i32_0 = arith.constant 0 : i32
    %c0_i32_1 = arith.constant 0 : i32
    return %arg0, %c0_i32, %c0_i32_0 : i32, i32, i32
  }
  func.func @transform_4(%arg0: i32, %arg1: i32) -> (i32, i32, i32) {
    %c0_i32 = arith.constant 0 : i32
    %c0_i32_0 = arith.constant 0 : i32
    %c0_i32_1 = arith.constant 0 : i32
    return %arg0, %c0_i32, %c0_i32_0 : i32, i32, i32
  }
  func.func @transform_5(%arg0: i32, %arg1: i32) -> (i32, i32, i32) {
    %c0_i32 = arith.constant 0 : i32
    %c0_i32_0 = arith.constant 0 : i32
    %c0_i32_1 = arith.constant 0 : i32
    return %arg0, %c0_i32, %c0_i32_0 : i32, i32, i32
  }
  func.func @transform_6(%arg0: i32, %arg1: i32) -> (i32, i32, i32) {
    %c0_i32 = arith.constant 0 : i32
    %c0_i32_0 = arith.constant 0 : i32
    %c0_i32_1 = arith.constant 0 : i32
    return %arg0, %c0_i32, %c0_i32_0 : i32, i32, i32
  }
  func.func @transform_7(%arg0: i32, %arg1: i32) -> (i32, i32, i32) {
    %c0_i32 = arith.constant 0 : i32
    %c0_i32_0 = arith.constant 0 : i32
    %c0_i32_1 = arith.constant 0 : i32
    return %arg0, %c0_i32, %c0_i32_0 : i32, i32, i32
  }
  func.func @transform_8(%arg0: i32, %arg1: i32) -> (i32, i32, i32) {
    %c0_i32 = arith.constant 0 : i32
    %c0_i32_0 = arith.constant 0 : i32
    %c0_i32_1 = arith.constant 0 : i32
    return %arg0, %c0_i32, %c0_i32_0 : i32, i32, i32
  }
  func.func @transform_9(%arg0: i32, %arg1: i32) -> (i32, i32, i32) {
    %c0_i32 = arith.constant 0 : i32
    %c0_i32_0 = arith.constant 0 : i32
    %c0_i32_1 = arith.constant 0 : i32
    return %arg0, %c0_i32, %c0_i32_0 : i32, i32, i32
  }
  func.func @transform_10(%arg0: i32, %arg1: i32) -> (i32, i32, i32, i32, i32) {
    %c0_i32 = arith.constant 0 : i32
    %c0_i32_0 = arith.constant 0 : i32
    %c0_i32_1 = arith.constant 0 : i32
    %c0_i32_2 = arith.constant 0 : i32
    return %arg0, %c0_i32, %arg1, %c0_i32_0, %c0_i32_1 : i32, i32, i32, i32, i32
  }
}

</mosaic_0001>

<llo_original>
// kernel: scinet_tree_forward.2
$region0: #{scinet_tree_forward.2}
  #allocation0 [shape = 'u32[]', space=smem, size = 0x4, offset = 0x4, fixed_abs, tag = 'smem constant byte address 0x4 - core index']
  #allocation1 [shape = 'u32[72,128]{1,0:T(1,128)}', space=vmem, size = 0x9000, scoped, tag = 'internal scratch']
  %s0 = inlined_call_operand.vmem [shape: f32[1,2,8,8], index: 0, kind: input, shape index: {}]
  %s1 = inlined_call_operand.vmem [shape: f32[1,2,8,8], index: 1, kind: input, shape index: {}]
  %s2 = inlined_call_operand.vmem [shape: f32[1,16,80], index: 2, kind: input, shape index: {}]
  %s3 = inlined_call_operand.vmem [shape: f32[1,16,1], index: 3, kind: input, shape index: {}]
  %s4 = inlined_call_operand.vmem [shape: f32[1,16,48], index: 4, kind: input, shape index: {}]
  %s5 = inlined_call_operand.vmem [shape: f32[1,16,1], index: 5, kind: input, shape index: {}]
  %s6 = inlined_call_operand.vmem [shape: f32[1,16,80], index: 6, kind: input, shape index: {}]
  %s7 = inlined_call_operand.vmem [shape: f32[1,16,1], index: 7, kind: input, shape index: {}]
  %s8 = inlined_call_operand.vmem [shape: f32[1,16,48], index: 8, kind: input, shape index: {}]
  %s9 = inlined_call_operand.vmem [shape: f32[1,16,1], index: 9, kind: input, shape index: {}]
  %s10 = inlined_call_operand.vmem [shape: f32[1,2,2,8,8], index: 10, kind: output, shape index: {}]
  %s11 = sld [smem:[#allocation0]]
  $region107: #{scinet_tree_forward.2} parent=0
    _
  %s13 = ssub.s32 1, %s11
  %s14 = scalar_select 0, %s13, %s11
  $region1: #{scinet_tree_forward.2} parent=0
    #allocation2 [shape = 'u8[16384]{0}', space=vmem, size = 0x4000, scoped, tag = 'output window, operand 0']
    loop: start=0, step=1, limit=4
    $region2: #{scinet_tree_forward.2} parent=1 // loop_pre_header
      _
    $region3: #{scinet_tree_forward.2} parent=1 // loop_header
      %s16 = sphi 0, %s20
      %p17 = scmp.ge.s32.totalorder %s16, 4
      %s23 = sphi 0, %s35
      %s24 = sphi 0, %s31
      %s25 = sphi 0, %s23
      %s26 = sphi 0, %s24
      %s27 = sphi 0, %s25
      %s28 = sphi 0, %s26
      %s40 = sphi 0, %s42
      %s43 = sphi 0, %s40
      %s44 = sphi 0, %s43
      %s60 = sphi 0, %s44
      %s68 = sphi 0, %s70
      %s71 = sphi 0, %s68
      %s72 = sphi 0, %s71
      %s88 = sphi 0, %s72
      %s94 = sphi 0, %s96
      %s97 = sphi 0, %s94
      %s98 = sphi 0, %s97
      %s114 = sphi 0, %s98
      %s120 = sphi 0, %s122
      %s123 = sphi 0, %s120
      %s124 = sphi 0, %s123
      %s140 = sphi 0, %s124
      %s146 = sphi 0, %s148
      %s149 = sphi 0, %s146
      %s150 = sphi 0, %s149
      %s166 = sphi 0, %s150
      %s172 = sphi 0, %s174
      %s175 = sphi 0, %s172
      %s176 = sphi 0, %s175
      %s192 = sphi 0, %s176
      %s198 = sphi 0, %s200
      %s201 = sphi 0, %s198
      %s202 = sphi 0, %s201
      %s218 = sphi 0, %s202
      %s224 = sphi 0, %s226
      %s227 = sphi 0, %s224
      %s228 = sphi 0, %s227
      %s244 = sphi 0, %s228
      %s250 = sphi 0, %s252
      %s253 = sphi 0, %s250
      %s254 = sphi 0, %s253
      %s270 = sphi 0, %s254
      %s276 = sphi 0, %s278
      %s279 = sphi 0, %s276
      %s280 = sphi 0, %s279
      %s296 = sphi 0, %s280
      %s304 = sphi 0, %s306
      %s307 = sphi 0, %s304
      %s308 = sphi 0, %s307
      %s324 = sphi 0, %s308
    $region4: #{scinet_tree_forward.2} parent=1 // loop_header_branch
      %19 = sbr.rel (%p17) target = $region8
    $region5: #{scinet_tree_forward.2} parent=1 // loop_body
      %s21 = ssub.s32 %s16, 1
      %s22 = ssub.s32 %s16, 2
      %s29 = sadd.s32 1, %s24
      %p30 = scmp.ge.s32.totalorder %s29, 2
      %s31 = scalar_select %p30, 0, %s29
      %s32 = sadd.s32 1, %s23
      %s33 = scalar_select %p30, %s32, %s23
      %p34 = scmp.ge.s32.totalorder %s33, 1
      %s35 = scalar_select %p34, 0, %s33
      %s36 = ssub.s32 %s23, %s35
      %s37 = ssub.s32 %s24, %s31
      %s38 = sor.u32 %s36, %s37
      %p39 = scmp.eq.s32.totalorder %s38, 0
      %s41 = sadd.s32 %s40, 1
      %s42 = scalar_select %p39, %s40, %s41
      %p45 = pneg %p39
      %p46 = scmp.eq.s32.totalorder %s16, 1
      %p47 = por %p45, %p46
      %p48 = scmp.ne.s32.totalorder %s40, %s43
      %p49 = scmp.eq.s32.totalorder %s16, 0
      %p50 = por %p48, %p49
      %p51 = scmp.ne.s32.totalorder %s40, %s43
      %p52 = scmp.eq.s32.totalorder %s21, 1
      %p53 = por %p51, %p52
      %p54 = scmp.ne.s32.totalorder %s43, %s44
      %p55 = scmp.eq.s32.totalorder %s21, 0
      %p56 = por %p54, %p55
      %p57 = scmp.ne.s32.totalorder %s43, %s44
      %p58 = scmp.eq.s32.totalorder %s22, 1
      %p59 = por %p57, %p58
      %p61 = scmp.ne.s32.totalorder %s44, %s60
      %p62 = scmp.eq.s32.totalorder %s22, 0
      %p63 = por %p61, %p62
      %s64 = ssub.s32 %s23, %s35
      %s65 = ssub.s32 %s24, %s31
      %s66 = sor.u32 %s64, %s65
      %p67 = scmp.eq.s32.totalorder %s66, 0
      %s69 = sadd.s32 %s68, 1
      %s70 = scalar_select %p67, %s68, %s69
      %p73 = pneg %p67
      %p74 = scmp.eq.s32.totalorder %s16, 1
      %p75 = por %p73, %p74
      %p76 = scmp.ne.s32.totalorder %s68, %s71
      %p77 = scmp.eq.s32.totalorder %s16, 0
      %p78 = por %p76, %p77
      %p79 = scmp.ne.s32.totalorder %s68, %s71
      %p80 = scmp.eq.s32.totalorder %s21, 1
      %p81 = por %p79, %p80
      %p82 = scmp.ne.s32.totalorder %s71, %s72
      %p83 = scmp.eq.s32.totalorder %s21, 0
      %p84 = por %p82, %p83
      %p85 = scmp.ne.s32.totalorder %s71, %s72
      %p86 = scmp.eq.s32.totalorder %s22, 1
      %p87 = por %p85, %p86
      %p89 = scmp.ne.s32.totalorder %s72, %s88
      %p90 = scmp.eq.s32.totalorder %s22, 0
      %p91 = por %p89, %p90
      %s92 = ssub.s32 %s23, %s35
      %p93 = scmp.eq.s32.totalorder %s92, 0
      %s95 = sadd.s32 %s94, 1
      %s96 = scalar_select %p93, %s94, %s95
      %p99 = pneg %p93
      %p100 = scmp.eq.s32.totalorder %s16, 1
      %p101 = por %p99, %p100
      %p102 = scmp.ne.s32.totalorder %s94, %s97
      %p103 = scmp.eq.s32.totalorder %s16, 0
      %p104 = por %p102, %p103
      %p105 = scmp.ne.s32.totalorder %s94, %s97
      %p106 = scmp.eq.s32.totalorder %s21, 1
      %p107 = por %p105, %p106
      %p108 = scmp.ne.s32.totalorder %s97, %s98
      %p109 = scmp.eq.s32.totalorder %s21, 0
      %p110 = por %p108, %p109
      %p111 = scmp.ne.s32.totalorder %s97, %s98
      %p112 = scmp.eq.s32.totalorder %s22, 1
      %p113 = por %p111, %p112
      %p115 = scmp.ne.s32.totalorder %s98, %s114
      %p116 = scmp.eq.s32.totalorder %s22, 0
      %p117 = por %p115, %p116
      %s118 = ssub.s32 %s23, %s35
      %p119 = scmp.eq.s32.totalorder %s118, 0
      %s121 = sadd.s32 %s120, 1
      %s122 = scalar_select %p119, %s120, %s121
      %p125 = pneg %p119
      %p126 = scmp.eq.s32.totalorder %s16, 1
      %p127 = por %p125, %p126
      %p128 = scmp.ne.s32.totalorder %s120, %s123
      %p129 = scmp.eq.s32.totalorder %s16, 0
      %p130 = por %p128, %p129
      %p131 = scmp.ne.s32.totalorder %s120, %s123
      %p132 = scmp.eq.s32.totalorder %s21, 1
      %p133 = por %p131, %p132
      %p134 = scmp.ne.s32.totalorder %s123, %s124
      %p135 = scmp.eq.s32.totalorder %s21, 0
      %p136 = por %p134, %p135
      %p137 = scmp.ne.s32.totalorder %s123, %s124
      %p138 = scmp.eq.s32.totalorder %s22, 1
      %p139 = por %p137, %p138
      %p141 = scmp.ne.s32.totalorder %s124, %s140
      %p142 = scmp.eq.s32.totalorder %s22, 0
      %p143 = por %p141, %p142
      %s144 = ssub.s32 %s23, %s35
      %p145 = scmp.eq.s32.totalorder %s144, 0
      %s147 = sadd.s32 %s146, 1
      %s148 = scalar_select %p145, %s146, %s147
      %p151 = pneg %p145
      %p152 = scmp.eq.s32.totalorder %s16, 1
      %p153 = por %p151, %p152
      %p154 = scmp.ne.s32.totalorder %s146, %s149
      %p155 = scmp.eq.s32.totalorder %s16, 0
      %p156 = por %p154, %p155
      %p157 = scmp.ne.s32.totalorder %s146, %s149
      %p158 = scmp.eq.s32.totalorder %s21, 1
      %p159 = por %p157, %p158
      %p160 = scmp.ne.s32.totalorder %s149, %s150
      %p161 = scmp.eq.s32.totalorder %s21, 0
      %p162 = por %p160, %p161
      %p163 = scmp.ne.s32.totalorder %s149, %s150
      %p164 = scmp.eq.s32.totalorder %s22, 1
      %p165 = por %p163, %p164
      %p167 = scmp.ne.s32.totalorder %s150, %s166
      %p168 = scmp.eq.s32.totalorder %s22, 0
      %p169 = por %p167, %p168
      %s170 = ssub.s32 %s23, %s35
      %p171 = scmp.eq.s32.totalorder %s170, 0
      %s173 = sadd.s32 %s172, 1
      %s174 = scalar_select %p171, %s172, %s173
      %p177 = pneg %p171
      %p178 = scmp.eq.s32.totalorder %s16, 1
      %p179 = por %p177, %p178
      %p180 = scmp.ne.s32.totalorder %s172, %s175
      %p181 = scmp.eq.s32.totalorder %s16, 0
      %p182 = por %p180, %p181
      %p183 = scmp.ne.s32.totalorder %s172, %s175
      %p184 = scmp.eq.s32.totalorder %s21, 1
      %p185 = por %p183, %p184
      %p186 = scmp.ne.s32.totalorder %s175, %s176
      %p187 = scmp.eq.s32.totalorder %s21, 0
      %p188 = por %p186, %p187
      %p189 = scmp.ne.s32.totalorder %s175, %s176
      %p190 = scmp.eq.s32.totalorder %s22, 1
      %p191 = por %p189, %p190
      %p193 = scmp.ne.s32.totalorder %s176, %s192
      %p194 = scmp.eq.s32.totalorder %s22, 0
      %p195 = por %p193, %p194
      %s196 = ssub.s32 %s23, %s35
      %p197 = scmp.eq.s32.totalorder %s196, 0
      %s199 = sadd.s32 %s198, 1
      %s200 = scalar_select %p197, %s198, %s199
      %p203 = pneg %p197
      %p204 = scmp.eq.s32.totalorder %s16, 1
      %p205 = por %p203, %p204
      %p206 = scmp.ne.s32.totalorder %s198, %s201
      %p207 = scmp.eq.s32.totalorder %s16, 0
      %p208 = por %p206, %p207
      %p209 = scmp.ne.s32.totalorder %s198, %s201
      %p210 = scmp.eq.s32.totalorder %s21, 1
      %p211 = por %p209, %p210
      %p212 = scmp.ne.s32.totalorder %s201, %s202
      %p213 = scmp.eq.s32.totalorder %s21, 0
      %p214 = por %p212, %p213
      %p215 = scmp.ne.s32.totalorder %s201, %s202
      %p216 = scmp.eq.s32.totalorder %s22, 1
      %p217 = por %p215, %p216
      %p219 = scmp.ne.s32.totalorder %s202, %s218
      %p220 = scmp.eq.s32.totalorder %s22, 0
      %p221 = por %p219, %p220
      %s222 = ssub.s32 %s23, %s35
      %p223 = scmp.eq.s32.totalorder %s222, 0
      %s225 = sadd.s32 %s224, 1
      %s226 = scalar_select %p223, %s224, %s225
      %p229 = pneg %p223
      %p230 = scmp.eq.s32.totalorder %s16, 1
      %p231 = por %p229, %p230
      %p232 = scmp.ne.s32.totalorder %s224, %s227
      %p233 = scmp.eq.s32.totalorder %s16, 0
      %p234 = por %p232, %p233
      %p235 = scmp.ne.s32.totalorder %s224, %s227
      %p236 = scmp.eq.s32.totalorder %s21, 1
      %p237 = por %p235, %p236
      %p238 = scmp.ne.s32.totalorder %s227, %s228
      %p239 = scmp.eq.s32.totalorder %s21, 0
      %p240 = por %p238, %p239
      %p241 = scmp.ne.s32.totalorder %s227, %s228
      %p242 = scmp.eq.s32.totalorder %s22, 1
      %p243 = por %p241, %p242
      %p245 = scmp.ne.s32.totalorder %s228, %s244
      %p246 = scmp.eq.s32.totalorder %s22, 0
      %p247 = por %p245, %p246
      %s248 = ssub.s32 %s23, %s35
      %p249 = scmp.eq.s32.totalorder %s248, 0
      %s251 = sadd.s32 %s250, 1
      %s252 = scalar_select %p249, %s250, %s251
      %p255 = pneg %p249
      %p256 = scmp.eq.s32.totalorder %s16, 1
      %p257 = por %p255, %p256
      %p258 = scmp.ne.s32.totalorder %s250, %s253
      %p259 = scmp.eq.s32.totalorder %s16, 0
      %p260 = por %p258, %p259
      %p261 = scmp.ne.s32.totalorder %s250, %s253
      %p262 = scmp.eq.s32.totalorder %s21, 1
      %p263 = por %p261, %p262
      %p264 = scmp.ne.s32.totalorder %s253, %s254
      %p265 = scmp.eq.s32.totalorder %s21, 0
      %p266 = por %p264, %p265
      %p267 = scmp.ne.s32.totalorder %s253, %s254
      %p268 = scmp.eq.s32.totalorder %s22, 1
      %p269 = por %p267, %p268
      %p271 = scmp.ne.s32.totalorder %s254, %s270
      %p272 = scmp.eq.s32.totalorder %s22, 0
      %p273 = por %p271, %p272
      %s274 = ssub.s32 %s23, %s35
      %p275 = scmp.eq.s32.totalorder %s274, 0
      %s277 = sadd.s32 %s276, 1
      %s278 = scalar_select %p275, %s276, %s277
      %p281 = pneg %p275
      %p282 = scmp.eq.s32.totalorder %s16, 1
      %p283 = por %p281, %p282
      %p284 = scmp.ne.s32.totalorder %s276, %s279
      %p285 = scmp.eq.s32.totalorder %s16, 0
      %p286 = por %p284, %p285
      %p287 = scmp.ne.s32.totalorder %s276, %s279
      %p288 = scmp.eq.s32.totalorder %s21, 1
      %p289 = por %p287, %p288
      %p290 = scmp.ne.s32.totalorder %s279, %s280
      %p291 = scmp.eq.s32.totalorder %s21, 0
      %p292 = por %p290, %p291
      %p293 = scmp.ne.s32.totalorder %s279, %s280
      %p294 = scmp.eq.s32.totalorder %s22, 1
      %p295 = por %p293, %p294
      %p297 = scmp.ne.s32.totalorder %s280, %s296
      %p298 = scmp.eq.s32.totalorder %s22, 0
      %p299 = por %p297, %p298
      %s300 = ssub.s32 %s23, %s35
      %s301 = ssub.s32 %s24, %s31
      %s302 = sor.u32 %s300, %s301
      %p303 = scmp.eq.s32.totalorder %s302, 0
      %s305 = sadd.s32 %s304, 1
      %s306 = scalar_select %p303, %s304, %s305
      %p309 = pneg %p303
      %p310 = scmp.eq.s32.totalorder %s16, 1
      %p311 = por %p309, %p310
      %p312 = scmp.ne.s32.totalorder %s304, %s307
      %p313 = scmp.eq.s32.totalorder %s16, 0
      %p314 = por %p312, %p313
      %p315 = scmp.ne.s32.totalorder %s304, %s307
      %p316 = scmp.eq.s32.totalorder %s21, 1
      %p317 = por %p315, %p316
      %p318 = scmp.ne.s32.totalorder %s307, %s308
      %p319 = scmp.eq.s32.totalorder %s21, 0
      %p320 = por %p318, %p319
      %p321 = scmp.ne.s32.totalorder %s307, %s308
      %p322 = scmp.eq.s32.totalorder %s22, 1
      %p323 = por %p321, %p322
      %p325 = scmp.ne.s32.totalorder %s308, %s324
      %p326 = scmp.eq.s32.totalorder %s22, 0
      %p327 = por %p325, %p326
      %p328 = scmp.le.s32.totalorder 1, %s16
      %p329 = scmp.lt.s32.totalorder %s16, 3
      %p330 = pnand %p328, %p329
      %p331 = pneg %p330
      // Predicated region
      $region9: #{scinet_tree_forward.2} parent=5 // pred_check
        _
      $region10: #{scinet_tree_forward.2} parent=5 // pred_check_branch
        %333 = sbr.rel (%p330) target = $region12
      $region11: #{scinet_tree_forward.2} parent=5 // pred_region
        %s334 = ssub.s32 %s16, 1
        // Predicated region
        $region13: #{scinet_tree_forward.2} parent=11 // pred_check
          %p335 = pneg %p110
        $region14: #{scinet_tree_forward.2} parent=11 // pred_check_branch
          %337 = sbr.rel (%p335) target = $region16
        $region15: #{scinet_tree_forward.2} parent=11 // pred_region
          %p338 = scmp.lt.s32.totalorder %s25, 0
          %s339 = scalar_select %p338, %s25, 0
          %s340 = smul.addr %s339, 2
          %s341 = smul.addr %s340, 8
          %s342 = scalar_lea.vmem %s2, %s341
        $region16: #{scinet_tree_forward.2} parent=11 // pred_fallthru
          _
        // Predicated region
        $region17: #{scinet_tree_forward.2} parent=11 // pred_check
          %p343 = pneg %p136
        $region18: #{scinet_tree_forward.2} parent=11 // pred_check_branch
          %345 = sbr.rel (%p343) target = $region20
        $region19: #{scinet_tree_forward.2} parent=11 // pred_region
          %p346 = scmp.lt.s32.totalorder %s25, 0
          %s347 = scalar_select %p346, %s25, 0
          %s348 = smul.addr %s347, 2
          %s349 = smul.addr %s348, 8
          %s350 = scalar_lea.vmem %s3, %s349
        $region20: #{scinet_tree_forward.2} parent=11 // pred_fallthru
          _
        // Predicated region
        $region21: #{scinet_tree_forward.2} parent=11 // pred_check
          %p351 = pneg %p162
        $region22: #{scinet_tree_forward.2} parent=11 // pred_check_branch
          %353 = sbr.rel (%p351) target = $region24
        $region23: #{scinet_tree_forward.2} parent=11 // pred_region
          %p354 = scmp.lt.s32.totalorder %s25, 0
          %s355 = scalar_select %p354, %s25, 0
          %s356 = smul.addr %s355, 2
          %s357 = smul.addr %s356, 8
          %s358 = scalar_lea.vmem %s4, %s357
        $region24: #{scinet_tree_forward.2} parent=11 // pred_fallthru
          _
        // Predicated region
        $region25: #{scinet_tree_forward.2} parent=11 // pred_check
          %p359 = pneg %p188
        $region26: #{scinet_tree_forward.2} parent=11 // pred_check_branch
          %361 = sbr.rel (%p359) target = $region28
        $region27: #{scinet_tree_forward.2} parent=11 // pred_region
          %p362 = scmp.lt.s32.totalorder %s25, 0
          %s363 = scalar_select %p362, %s25, 0
          %s364 = smul.addr %s363, 2
          %s365 = smul.addr %s364, 8
          %s366 = scalar_lea.vmem %s5, %s365
        $region28: #{scinet_tree_forward.2} parent=11 // pred_fallthru
          _
        // Predicated region
        $region29: #{scinet_tree_forward.2} parent=11 // pred_check
          %p367 = pneg %p214
        $region30: #{scinet_tree_forward.2} parent=11 // pred_check_branch
          %369 = sbr.rel (%p367) target = $region32
        $region31: #{scinet_tree_forward.2} parent=11 // pred_region
          %p370 = scmp.lt.s32.totalorder %s25, 0
          %s371 = scalar_select %p370, %s25, 0
          %s372 = smul.addr %s371, 2
          %s373 = smul.addr %s372, 8
          %s374 = scalar_lea.vmem %s6, %s373
        $region32: #{scinet_tree_forward.2} parent=11 // pred_fallthru
          _
        // Predicated region
        $region33: #{scinet_tree_forward.2} parent=11 // pred_check
          %p375 = pneg %p240
        $region34: #{scinet_tree_forward.2} parent=11 // pred_check_branch
          %377 = sbr.rel (%p375) target = $region36
        $region35: #{scinet_tree_forward.2} parent=11 // pred_region
          %p378 = scmp.lt.s32.totalorder %s25, 0
          %s379 = scalar_select %p378, %s25, 0
          %s380 = smul.addr %s379, 2
          %s381 = smul.addr %s380, 8
          %s382 = scalar_lea.vmem %s7, %s381
        $region36: #{scinet_tree_forward.2} parent=11 // pred_fallthru
          _
        // Predicated region
        $region37: #{scinet_tree_forward.2} parent=11 // pred_check
          %p383 = pneg %p266
        $region38: #{scinet_tree_forward.2} parent=11 // pred_check_branch
          %385 = sbr.rel (%p383) target = $region40
        $region39: #{scinet_tree_forward.2} parent=11 // pred_region
          %p386 = scmp.lt.s32.totalorder %s25, 0
          %s387 = scalar_select %p386, %s25, 0
          %s388 = smul.addr %s387, 2
          %s389 = smul.addr %s388, 8
          %s390 = scalar_lea.vmem %s8, %s389
        $region40: #{scinet_tree_forward.2} parent=11 // pred_fallthru
          _
        // Predicated region
        $region41: #{scinet_tree_forward.2} parent=11 // pred_check
          %p391 = pneg %p292
        $region42: #{scinet_tree_forward.2} parent=11 // pred_check_branch
          %393 = sbr.rel (%p391) target = $region44
        $region43: #{scinet_tree_forward.2} parent=11 // pred_region
          %p394 = scmp.lt.s32.totalorder %s25, 0
          %s395 = scalar_select %p394, %s25, 0
          %s396 = smul.addr %s395, 2
          %s397 = smul.addr %s396, 8
          %s398 = scalar_lea.vmem %s9, %s397
        $region44: #{scinet_tree_forward.2} parent=11 // pred_fallthru
          _
      $region12: #{scinet_tree_forward.2} parent=5 // pred_fallthru
        _
      %p399 = scmp.lt.s32.totalorder %s16, 2
      // Predicated region
      $region45: #{scinet_tree_forward.2} parent=5 // pred_check
        %p400 = pneg %p399
      $region46: #{scinet_tree_forward.2} parent=5 // pred_check_branch
        %402 = sbr.rel (%p400) target = $region48
      $region47: #{scinet_tree_forward.2} parent=5 // pred_region
        // Predicated region
        $region49: #{scinet_tree_forward.2} parent=47 // pred_check
          %p403 = pneg %p50
        $region50: #{scinet_tree_forward.2} parent=47 // pred_check_branch
          %405 = sbr.rel (%p403) target = $region52
        $region51: #{scinet_tree_forward.2} parent=47 // pred_region
          %p406 = scmp.lt.s32.totalorder %s23, 0
          %s407 = scalar_select %p406, %s23, 0
          %p408 = scmp.lt.s32.totalorder %s24, 1
          %s409 = scalar_select %p408, %s24, 1
          %s410 = smul.addr %s407, 2
          %s411 = sadd.s32 %s409, %s410
          %s412 = smul.addr %s411, 8
          %s413 = scalar_lea.vmem %s0, %s412
        $region52: #{scinet_tree_forward.2} parent=47 // pred_fallthru
          _
        // Predicated region
        $region53: #{scinet_tree_forward.2} parent=47 // pred_check
          %p414 = pneg %p78
        $region54: #{scinet_tree_forward.2} parent=47 // pred_check_branch
          %416 = sbr.rel (%p414) target = $region56
        $region55: #{scinet_tree_forward.2} parent=47 // pred_region
          %p417 = scmp.lt.s32.totalorder %s23, 0
          %s418 = scalar_select %p417, %s23, 0
          %p419 = scmp.lt.s32.totalorder %s24, 1
          %s420 = scalar_select %p419, %s24, 1
          %s421 = smul.addr %s418, 2
          %s422 = sadd.s32 %s420, %s421
          %s423 = smul.addr %s422, 8
          %s424 = scalar_lea.vmem %s1, %s423
        $region56: #{scinet_tree_forward.2} parent=47 // pred_fallthru
          _
      $region48: #{scinet_tree_forward.2} parent=5 // pred_fallthru
        _
      %p425 = scmp.le.s32.totalorder 1, %s16
      %p426 = scmp.lt.s32.totalorder %s16, 3
      %p427 = pnand %p425, %p426
      %p428 = pneg %p427
      // Predicated region
      $region57: #{scinet_tree_forward.2} parent=5 // pred_check
        _
      $region58: #{scinet_tree_forward.2} parent=5 // pred_check_branch
        %430 = sbr.rel (%p427) target = $region60
      $region59: #{scinet_tree_forward.2} parent=5 // pred_region
        %s431 = ssub.s32 %s16, 1
        %p432 = scmp.lt.s32.totalorder %s25, 0
        %s433 = scalar_select %p432, %s25, 0
        %p434 = scmp.lt.s32.totalorder %s26, 1
        %s435 = scalar_select %p434, %s26, 1
        %s436 = smul.addr %s433, 2
        %s437 = sadd.s32 %s435, %s436
        %s438 = smul.addr %s437, 8
        %s439 = scalar_lea.vmem %s0, %s438
        %p440 = pneg %p56
        %p441 = pneg %p53
        %p442 = scmp.lt.s32.totalorder %s25, 0
        %s443 = scalar_select %p442, %s25, 0
        %p444 = scmp.lt.s32.totalorder %s26, 1
        %s445 = scalar_select %p444, %s26, 1
        %s446 = smul.addr %s443, 2
        %s447 = sadd.s32 %s445, %s446
        %s448 = smul.addr %s447, 8
        %s449 = scalar_lea.vmem %s1, %s448
        %p450 = pneg %p84
        %p451 = pneg %p81
        %p452 = scmp.lt.s32.totalorder %s25, 0
        %s453 = scalar_select %p452, %s25, 0
        %s454 = smul.addr %s453, 2
        %s455 = smul.addr %s454, 8
        %s456 = scalar_lea.vmem %s2, %s455
        %p457 = pneg %p110
        %p458 = pneg %p107
        %p459 = scmp.lt.s32.totalorder %s25, 0
        %s460 = scalar_select %p459, %s25, 0
        %s461 = smul.addr %s460, 2
        %s462 = smul.addr %s461, 8
        %s463 = scalar_lea.vmem %s3, %s462
        %p464 = pneg %p136
        %p465 = pneg %p133
        %p466 = scmp.lt.s32.totalorder %s25, 0
        %s467 = scalar_select %p466, %s25, 0
        %s468 = smul.addr %s467, 2
        %s469 = smul.addr %s468, 8
        %s470 = scalar_lea.vmem %s4, %s469
        %p471 = pneg %p162
        %p472 = pneg %p159
        %p473 = scmp.lt.s32.totalorder %s25, 0
        %s474 = scalar_select %p473, %s25, 0
        %s475 = smul.addr %s474, 2
        %s476 = smul.addr %s475, 8
        %s477 = scalar_lea.vmem %s5, %s476
        %p478 = pneg %p188
        %p479 = pneg %p185
        %p480 = scmp.lt.s32.totalorder %s25, 0
        %s481 = scalar_select %p480, %s25, 0
        %s482 = smul.addr %s481, 2
        %s483 = smul.addr %s482, 8
        %s484 = scalar_lea.vmem %s6, %s483
        %p485 = pneg %p214
        %p486 = pneg %p211
        %p487 = scmp.lt.s32.totalorder %s25, 0
        %s488 = scalar_select %p487, %s25, 0
        %s489 = smul.addr %s488, 2
        %s490 = smul.addr %s489, 8
        %s491 = scalar_lea.vmem %s7, %s490
        %p492 = pneg %p240
        %p493 = pneg %p237
        %p494 = scmp.lt.s32.totalorder %s25, 0
        %s495 = scalar_select %p494, %s25, 0
        %s496 = smul.addr %s495, 2
        %s497 = smul.addr %s496, 8
        %s498 = scalar_lea.vmem %s8, %s497
        %p499 = pneg %p266
        %p500 = pneg %p263
        %p501 = scmp.lt.s32.totalorder %s25, 0
        %s502 = scalar_select %p501, %s25, 0
        %s503 = smul.addr %s502, 2
        %s504 = smul.addr %s503, 8
        %s505 = scalar_lea.vmem %s9, %s504
        %p506 = pneg %p292
        %p507 = pneg %p289
        %p508 = pneg %p320
        %p509 = pneg %p317
        %s510 = sand.u32 %s307, 1
        %s511 = sand.u32 %s307, 1
        %s512 = smul.addr %s511, 16
        %s513 = scalar_lea.vmem [#allocation2], %s512
        %p514 = scmp.lt.s32.totalorder %s25, 0
        %s515 = scalar_select %p514, %s25, 0
        %p516 = scmp.lt.s32.totalorder %s26, 1
        %s517 = scalar_select %p516, %s26, 1
        %s518 = smul.addr %s515, 2
        %s519 = sadd.s32 %s517, %s518
        %s520 = smul.addr %s519, 8
        %s521 = scalar_lea.vmem %s0, %s520
        %p522 = scmp.lt.s32.totalorder %s25, 0
        %s523 = scalar_select %p522, %s25, 0
        %p524 = scmp.lt.s32.totalorder %s26, 1
        %s525 = scalar_select %p524, %s26, 1
        %s526 = smul.addr %s523, 2
        %s527 = sadd.s32 %s525, %s526
        %s528 = smul.addr %s527, 8
        %s529 = scalar_lea.vmem %s1, %s528
        %p530 = scmp.lt.s32.totalorder %s25, 0
        %s531 = scalar_select %p530, %s25, 0
        %s532 = smul.addr %s531, 2
        %s533 = smul.addr %s532, 8
        %s534 = scalar_lea.vmem %s2, %s533
        %p535 = scmp.lt.s32.totalorder %s25, 0
        %s536 = scalar_select %p535, %s25, 0
        %s537 = smul.addr %s536, 2
        %s538 = smul.addr %s537, 8
        %s539 = scalar_lea.vmem %s3, %s538
        %p540 = scmp.lt.s32.totalorder %s25, 0
        %s541 = scalar_select %p540, %s25, 0
        %s542 = smul.addr %s541, 2
        %s543 = smul.addr %s542, 8
        %s544 = scalar_lea.vmem %s4, %s543
        %p545 = scmp.lt.s32.totalorder %s25, 0
        %s546 = scalar_select %p545, %s25, 0
        %s547 = smul.addr %s546, 2
        %s548 = smul.addr %s547, 8
        %s549 = scalar_lea.vmem %s5, %s548
        %p550 = scmp.lt.s32.totalorder %s25, 0
        %s551 = scalar_select %p550, %s25, 0
        %s552 = smul.addr %s551, 2
        %s553 = smul.addr %s552, 8
        %s554 = scalar_lea.vmem %s6, %s553
        %p555 = scmp.lt.s32.totalorder %s25, 0
        %s556 = scalar_select %p555, %s25, 0
        %s557 = smul.addr %s556, 2
        %s558 = smul.addr %s557, 8
        %s559 = scalar_lea.vmem %s7, %s558
        %p560 = scmp.lt.s32.totalorder %s25, 0
        %s561 = scalar_select %p560, %s25, 0
        %s562 = smul.addr %s561, 2
        %s563 = smul.addr %s562, 8
        %s564 = scalar_lea.vmem %s8, %s563
        %p565 = scmp.lt.s32.totalorder %s25, 0
        %s566 = scalar_select %p565, %s25, 0
        %s567 = smul.addr %s566, 2
        %s568 = smul.addr %s567, 8
        %s569 = scalar_lea.vmem %s9, %s568
        %v570 = vld [vmem:[%s521] sm:$0xff]
        %v571 = vld [vmem:[%s529] sm:$0xff]
        %573 = vset.pattern.permute.xlu0 0
        %574 = vperm.xlu0 %573, %v570
        %v575 = vpop.permute.xlu0 %574
        %577 = vset.pattern.permute.xlu0 7
        %578 = vperm.xlu0 %577, %v570
        %v579 = vpop.permute.xlu0 %578
        %581 = vrot.lane.b32.xlu0 %v570, 3
        %v582 = vpop.permute.xlu0 %581
        %vm584 = vcmask 23552
        %v585 = vsel %vm584, %v575, %v582
        %vm586 = vcmask 89088
        %v587 = vsel %vm586, %v585, %v579
        %589 = vset.pattern.permute.xlu0 0
        %590 = vperm.xlu0 %589, %v571
        %v591 = vpop.permute.xlu0 %590
        %593 = vset.pattern.permute.xlu0 7
        %594 = vperm.xlu0 %593, %v571
        %v595 = vpop.permute.xlu0 %594
        %597 = vrot.lane.b32.xlu0 %v571, 3
        %v598 = vpop.permute.xlu0 %597
        %v600 = vsel %vm584, %v591, %v598
        %v601 = vsel %vm586, %v600, %v595
        %603 = vrot.lane.b32.xlu0 %v587, 127
        %v604 = vpop.permute.xlu0 %603
        %606 = vrot.lane.b32.xlu0 %v587, 126
        %v607 = vpop.permute.xlu0 %606
        %609 = vrot.lane.b32.xlu0 %v587, 125
        %v610 = vpop.permute.xlu0 %609
        %612 = vrot.lane.b32.xlu0 %v587, 124
        %v613 = vpop.permute.xlu0 %612
        %616 = vrot.lane.b32.xlu0 %v601, 127
        %v617 = vpop.permute.xlu0 %616
        %619 = vrot.lane.b32.xlu0 %v601, 126
        %v620 = vpop.permute.xlu0 %619
        %622 = vrot.lane.b32.xlu0 %v601, 125
        %v623 = vpop.permute.xlu0 %622
        %625 = vrot.lane.b32.xlu0 %v601, 124
        %v626 = vpop.permute.xlu0 %625
        %v628 = vld [vmem:[%s534] sm:$0xff]
        %v629 = vld [vmem:[%s534 + $0x8] sm:$0xff]
        %vm630 = vcmask 654336
        %v632 = vsel %vm630, %v628, 0
        %v635 = vsel %vm630, %v629, 0
        %637 = vmatpush.msra.mxu0 0.0
        %638 = vmatpush.msra.mxu0 0.0
        %639 = vmatpush.msra.mxu0 0.0
        %640 = vmatpush.msra.mxu0 0.0
        %641 = vmatpush.msra.mxu0 0.0
        %642 = vmatpush.msra.mxu0 0.0
        %643 = vmatpush.msra.mxu0 %v626
        %644 = vmatpush.msra.mxu0 %v623
        %645 = vmatpush.msra.mxu0 %v620
        %646 = vmatpush.msra.mxu0 %v617
        %647 = vmatpush.msra.mxu0 %v601
        %648 = vmatpush.msra.mxu0 %v613
        %649 = vmatpush.msra.mxu0 %v610
        %650 = vmatpush.msra.mxu0 %v607
        %651 = vmatpush.msra.mxu0 %v604
        %652 = vmatpush.msra.mxu0 %v587
        %653 = vmatmul.f32.gmra.mxu0 %v632
        %v654 = vpop.f32.mrf.mxu0
        %v655 = vadd.f32 0.0, %v654
        %656 = vmatmul.f32.gmra.mxu0 %v635
        %v657 = vpop.f32.mrf.mxu0
        %v658 = vadd.f32 0.0, %v657
        %659 = vdwg.mxu0
        %v660 = vld [vmem:[%s539] sm:$0xff]
        %v661 = vld [vmem:[%s539 + $0x8] sm:$0xff]
        %663 = vset.pattern.permute.xlu0 0
        %664 = vperm.xlu0 %663, %v660
        %v665 = vpop.permute.xlu0 %664
        %668 = vset.pattern.permute.xlu0 0
        %669 = vperm.xlu0 %668, %v661
        %v670 = vpop.permute.xlu0 %669
        %v672 = vadd.f32 %v655, %v665
        %v673 = vadd.f32 %v658, %v670
        %vm674 = vcmp.gt.f32.partialorder %v672, 0.0
        %vm675 = vcmp.gt.f32.partialorder %v673, 0.0
        %v676 = vmul.f32 %v672, 0.01
        %v677 = vmul.f32 %v673, 0.01
        %v678 = vsel %vm674, %v672, %v676
        %v679 = vsel %vm675, %v673, %v677
        %682 = vrot.lane.b32.xlu0 %v678, 127
        %v683 = vpop.permute.xlu0 %682
        %684 = vrot.lane.b32.xlu0 %v679, 127
        %v685 = vpop.permute.xlu0 %684
        %688 = vrot.lane.b32.xlu0 %v678, 126
        %v689 = vpop.permute.xlu0 %688
        %690 = vrot.lane.b32.xlu0 %v679, 126
        %v691 = vpop.permute.xlu0 %690
        %v694 = vld [vmem:[%s544] sm:$0xff]
        %v695 = vld [vmem:[%s544 + $0x8] sm:$0xff]
        %vm696 = vcmask 392192
        %v698 = vsel %vm696, %v694, 0
        %v701 = vsel %vm696, %v695, 0
        %703 = vmatpush.msra.mxu0 0.0
        %704 = vmatpush.msra.mxu0 0.0
        %705 = vmatpush.msra.mxu0 0.0
        %706 = vmatpush.msra.mxu0 0.0
        %707 = vmatpush.msra.mxu0 0.0
        %708 = vmatpush.msra.mxu0 0.0
        %709 = vmatpush.msra.mxu0 0.0
        %710 = vmatpush.msra.mxu0 0.0
        %711 = vmatpush.msra.mxu0 0.0
        %712 = vmatpush.msra.mxu0 0.0
        %713 = vmatpush.msra.mxu0 %v691
        %714 = vmatpush.msra.mxu0 %v689
        %715 = vmatpush.msra.mxu0 %v685
        %716 = vmatpush.msra.mxu0 %v683
        %717 = vmatpush.msra.mxu0 %v679
        %718 = vmatpush.msra.mxu0 %v678
        %719 = vmatmul.f32.gmra.mxu0 %v698
        %v720 = vpop.f32.mrf.mxu0
        %v721 = vadd.f32 0.0, %v720
        %722 = vmatmul.f32.gmra.mxu0 %v701
        %v723 = vpop.f32.mrf.mxu0
        %v724 = vadd.f32 0.0, %v723
        %725 = vdwg.mxu0
        %v726 = vld [vmem:[%s549] sm:$0xff]
        %v727 = vld [vmem:[%s549 + $0x8] sm:$0xff]
        %729 = vset.pattern.permute.xlu0 0
        %730 = vperm.xlu0 %729, %v726
        %v731 = vpop.permute.xlu0 %730
        %734 = vset.pattern.permute.xlu0 0
        %735 = vperm.xlu0 %734, %v727
        %v736 = vpop.permute.xlu0 %735
        %v738 = vadd.f32 %v721, %v731
        %v739 = vadd.f32 %v724, %v736
        %v740 = vtanh.pop %v738
        %v741 = vtanh.pop %v739
        %v742 = vmul.f32 %v740, 1.442695
        %v743 = vpow.pop %v742
        %v744 = vmul.f32 %v571, %v743
        %v745 = vmul.f32 %v741, 1.442695
        %v746 = vpow.pop %v745
        %v747 = vmul.f32 %v570, %v746
        %749 = vset.pattern.permute.xlu0 0
        %750 = vperm.xlu0 %749, %v744
        %v751 = vpop.permute.xlu0 %750
        %753 = vset.pattern.permute.xlu0 7
        %754 = vperm.xlu0 %753, %v744
        %v755 = vpop.permute.xlu0 %754
        %757 = vrot.lane.b32.xlu0 %v744, 3
        %v758 = vpop.permute.xlu0 %757
        %v760 = vsel %vm584, %v751, %v758
        %v761 = vsel %vm586, %v760, %v755
        %763 = vset.pattern.permute.xlu0 0
        %764 = vperm.xlu0 %763, %v747
        %v765 = vpop.permute.xlu0 %764
        %767 = vset.pattern.permute.xlu0 7
        %768 = vperm.xlu0 %767, %v747
        %v769 = vpop.permute.xlu0 %768
        %771 = vrot.lane.b32.xlu0 %v747, 3
        %v772 = vpop.permute.xlu0 %771
        %v774 = vsel %vm584, %v765, %v772
        %v775 = vsel %vm586, %v774, %v769
        %777 = vrot.lane.b32.xlu0 %v761, 127
        %v778 = vpop.permute.xlu0 %777
        %780 = vrot.lane.b32.xlu0 %v761, 126
        %v781 = vpop.permute.xlu0 %780
        %783 = vrot.lane.b32.xlu0 %v761, 125
        %v784 = vpop.permute.xlu0 %783
        %786 = vrot.lane.b32.xlu0 %v761, 124
        %v787 = vpop.permute.xlu0 %786
        %790 = vrot.lane.b32.xlu0 %v775, 127
        %v791 = vpop.permute.xlu0 %790
        %793 = vrot.lane.b32.xlu0 %v775, 126
        %v794 = vpop.permute.xlu0 %793
        %796 = vrot.lane.b32.xlu0 %v775, 125
        %v797 = vpop.permute.xlu0 %796
        %799 = vrot.lane.b32.xlu0 %v775, 124
        %v800 = vpop.permute.xlu0 %799
        %v802 = vld [vmem:[%s554] sm:$0xff]
        %v803 = vld [vmem:[%s554 + $0x8] sm:$0xff]
        %v805 = vsel %vm630, %v802, 0
        %v808 = vsel %vm630, %v803, 0
        %810 = vmatpush.msra.mxu0 0.0
        %811 = vmatpush.msra.mxu0 0.0
        %812 = vmatpush.msra.mxu0 0.0
        %813 = vmatpush.msra.mxu0 0.0
        %814 = vmatpush.msra.mxu0 0.0
        %815 = vmatpush.msra.mxu0 0.0
        %816 = vmatpush.msra.mxu0 %v800
        %817 = vmatpush.msra.mxu0 %v797
        %818 = vmatpush.msra.mxu0 %v794
        %819 = vmatpush.msra.mxu0 %v791
        %820 = vmatpush.msra.mxu0 %v775
        %821 = vmatpush.msra.mxu0 %v787
        %822 = vmatpush.msra.mxu0 %v784
        %823 = vmatpush.msra.mxu0 %v781
        %824 = vmatpush.msra.mxu0 %v778
        %825 = vmatpush.msra.mxu0 %v761
        %826 = vmatmul.f32.gmra.mxu0 %v805
        %v827 = vpop.f32.mrf.mxu0
        %v828 = vadd.f32 0.0, %v827
        %829 = vmatmul.f32.gmra.mxu0 %v808
        %v830 = vpop.f32.mrf.mxu0
        %v831 = vadd.f32 0.0, %v830
        %832 = vdwg.mxu0
        %v833 = vld [vmem:[%s559] sm:$0xff]
        %v834 = vld [vmem:[%s559 + $0x8] sm:$0xff]
        %836 = vset.pattern.permute.xlu0 0
        %837 = vperm.xlu0 %836, %v833
        %v838 = vpop.permute.xlu0 %837
        %841 = vset.pattern.permute.xlu0 0
        %842 = vperm.xlu0 %841, %v834
        %v843 = vpop.permute.xlu0 %842
        %v845 = vadd.f32 %v828, %v838
        %v846 = vadd.f32 %v831, %v843
        %vm847 = vcmp.gt.f32.partialorder %v845, 0.0
        %vm848 = vcmp.gt.f32.partialorder %v846, 0.0
        %v849 = vmul.f32 %v845, 0.01
        %v850 = vmul.f32 %v846, 0.01
        %v851 = vsel %vm847, %v845, %v849
        %v852 = vsel %vm848, %v846, %v850
        %855 = vrot.lane.b32.xlu0 %v851, 127
        %v856 = vpop.permute.xlu0 %855
        %857 = vrot.lane.b32.xlu0 %v852, 127
        %v858 = vpop.permute.xlu0 %857
        %861 = vrot.lane.b32.xlu0 %v851, 126
        %v862 = vpop.permute.xlu0 %861
        %863 = vrot.lane.b32.xlu0 %v852, 126
        %v864 = vpop.permute.xlu0 %863
        %v867 = vld [vmem:[%s564] sm:$0xff]
        %v868 = vld [vmem:[%s564 + $0x8] sm:$0xff]
        %v870 = vsel %vm696, %v867, 0
        %v873 = vsel %vm696, %v868, 0
        %875 = vmatpush.msra.mxu0 0.0
        %876 = vmatpush.msra.mxu0 0.0
        %877 = vmatpush.msra.mxu0 0.0
        %878 = vmatpush.msra.mxu0 0.0
        %879 = vmatpush.msra.mxu0 0.0
        %880 = vmatpush.msra.mxu0 0.0
        %881 = vmatpush.msra.mxu0 0.0
        %882 = vmatpush.msra.mxu0 0.0
        %883 = vmatpush.msra.mxu0 0.0
        %884 = vmatpush.msra.mxu0 0.0
        %885 = vmatpush.msra.mxu0 %v864
        %886 = vmatpush.msra.mxu0 %v862
        %887 = vmatpush.msra.mxu0 %v858
        %888 = vmatpush.msra.mxu0 %v856
        %889 = vmatpush.msra.mxu0 %v852
        %890 = vmatpush.msra.mxu0 %v851
        %891 = vmatmul.f32.gmra.mxu0 %v870
        %v892 = vpop.f32.mrf.mxu0
        %v893 = vadd.f32 0.0, %v892
        %894 = vmatmul.f32.gmra.mxu0 %v873
        %v895 = vpop.f32.mrf.mxu0
        %v896 = vadd.f32 0.0, %v895
        %897 = vdwg.mxu0
        %v898 = vld [vmem:[%s569] sm:$0xff]
        %v899 = vld [vmem:[%s569 + $0x8] sm:$0xff]
        %901 = vset.pattern.permute.xlu0 0
        %902 = vperm.xlu0 %901, %v898
        %v903 = vpop.permute.xlu0 %902
        %906 = vset.pattern.permute.xlu0 0
        %907 = vperm.xlu0 %906, %v899
        %v908 = vpop.permute.xlu0 %907
        %v910 = vadd.f32 %v893, %v903
        %v911 = vadd.f32 %v896, %v908
        %v912 = vtanh.pop %v910
        %v913 = vtanh.pop %v911
        %v914 = vadd.f32 %v747, %v912
        %vm915 = vcmask 64512
        %916 = vst.msk [vmem:[%s513] sm:$0xff] %vm915, %v914
        %v917 = vsub.f32 %v744, %v913
        %s918 = scalar_lea.vmem %s513, 8 [#allocation2]
        %919 = vst.msk [vmem:[%s918] sm:$0xff] %vm915, %v917
        %s920 = sand.u32 %s307, 1
        %s921 = sand.u32 %s307, 1
        %s922 = smul.addr %s921, 16
        %s923 = scalar_lea.vmem [#allocation2], %s922
        // Predicated region
        $region61: #{scinet_tree_forward.2} parent=59 // pred_check
          %p924 = pneg %p317
        $region62: #{scinet_tree_forward.2} parent=59 // pred_check_branch
          %926 = sbr.rel (%p924) target = $region64
        $region63: #{scinet_tree_forward.2} parent=59 // pred_region
          %s927 = smul.addr %s25, 4
          %s928 = sadd.s32 %s26, %s927
          %s929 = smul.addr %s928, 8
          %s930 = scalar_lea.vmem %s10, %s929
          // Predicated region
          $region65: #{scinet_tree_forward.2} parent=63 // pred_check
            _
          $region66: #{scinet_tree_forward.2} parent=63 // pred_check_branch
            %932 = sbr.rel (0) target = $region68
          $region67: #{scinet_tree_forward.2} parent=63 // pred_region
            // Predicated region
            $region69: #{scinet_tree_forward.2} parent=67 // pred_check
              _
            $region70: #{scinet_tree_forward.2} parent=67 // pred_check_branch
              %934 = sbr.rel (0) target = $region72
            $region71: #{scinet_tree_forward.2} parent=67 // pred_region
              // Predicated region
              $region84: #{scinet_tree_forward.2} parent=71 // pred_check
                _
              $region85: #{scinet_tree_forward.2} parent=71 // pred_check_branch
                %952 = sbr.rel (0) target = $region87
              $region86: #{scinet_tree_forward.2} parent=71 // pred_region
                loop: start=0, step=1, limit=1
                $region88: #{scinet_tree_forward.2} parent=86 // loop_pre_header
                  _
                $region89: #{scinet_tree_forward.2} parent=86 // loop_header
                  %s954 = sphi 0, %s958
                  %p955 = scmp.ge.s32.totalorder %s954, 1
                  %s959 = sphi %s923, %s923
                  %s960 = sphi %s930, %s930
                $region90: #{scinet_tree_forward.2} parent=86 // loop_header_branch
                  %957 = sbr.rel (%p955) target = $region94
                $region91: #{scinet_tree_forward.2} parent=86 // loop_body
                  %v961 = vld [vmem:[%s959] sm:$0xff]
                  %962 = vst [vmem:[%s960] sm:$0xff] %v961
                  %v963 = vld [vmem:[%s959 + $0x8] sm:$0xff]
                  %964 = vst [vmem:[%s960 + $0x10] sm:$0xff] %v963
                $region92: #{scinet_tree_forward.2} parent=86 // loop_footer
                  %s958 = sadd.s32 1, %s954
                $region93: #{scinet_tree_forward.2} parent=86 // loop_footer_branch
                  %953 = sbr.rel target = $region89
                $region94: #{scinet_tree_forward.2} parent=86 // loop_exit
                  _
              $region87: #{scinet_tree_forward.2} parent=71 // pred_fallthru
                _
              // Predicated region
              $region95: #{scinet_tree_forward.2} parent=71 // pred_check
                _
              $region96: #{scinet_tree_forward.2} parent=71 // pred_check_branch
                %966 = sbr.rel target = $region98
              $region97: #{scinet_tree_forward.2} parent=71 // pred_region
                _
              $region98: #{scinet_tree_forward.2} parent=71 // pred_fallthru
                _
            $region72: #{scinet_tree_forward.2} parent=67 // pred_fallthru
              _
            // Predicated region
            $region73: #{scinet_tree_forward.2} parent=67 // pred_check
              _
            $region74: #{scinet_tree_forward.2} parent=67 // pred_check_branch
              %936 = sbr.rel target = $region76
            $region75: #{scinet_tree_forward.2} parent=67 // pred_region
              %s938 = ssub.s32 256, 1
              loop: start=0, step=1, limit=1
              $region77: #{scinet_tree_forward.2} parent=75 // loop_pre_header
                _
              $region78: #{scinet_tree_forward.2} parent=75 // loop_header
                %s940 = sphi 0, %s944
                %p941 = scmp.ge.s32.totalorder %s940, 1
                %s945 = sphi %s923, %s923
                %s946 = sphi %s930, %s930
              $region79: #{scinet_tree_forward.2} parent=75 // loop_header_branch
                %943 = sbr.rel (%p941) target = $region83
              $region80: #{scinet_tree_forward.2} parent=75 // loop_body
                %v947 = vld [vmem:[%s945] sm:%s938]
                %948 = vst [vmem:[%s946] sm:%s938] %v947
                %v949 = vld [vmem:[%s945 + $0x8] sm:%s938]
                %950 = vst [vmem:[%s946 + $0x10] sm:%s938] %v949
              $region81: #{scinet_tree_forward.2} parent=75 // loop_footer
                %s944 = sadd.s32 1, %s940
              $region82: #{scinet_tree_forward.2} parent=75 // loop_footer_branch
                %939 = sbr.rel target = $region78
              $region83: #{scinet_tree_forward.2} parent=75 // loop_exit
                _
            $region76: #{scinet_tree_forward.2} parent=67 // pred_fallthru
              _
          $region68: #{scinet_tree_forward.2} parent=63 // pred_fallthru
            _
          %967 = vnop
        $region64: #{scinet_tree_forward.2} parent=59 // pred_fallthru
          _
      $region60: #{scinet_tree_forward.2} parent=5 // pred_fallthru
        _
      %p968 = scmp.le.s32.totalorder 2, %s16
      // Predicated region
      $region99: #{scinet_tree_forward.2} parent=5 // pred_check
        %p969 = pneg %p968
      $region100: #{scinet_tree_forward.2} parent=5 // pred_check_branch
        %971 = sbr.rel (%p969) target = $region102
      $region101: #{scinet_tree_forward.2} parent=5 // pred_region
        %s972 = ssub.s32 %s16, 2
        // Predicated region
        $region103: #{scinet_tree_forward.2} parent=101 // pred_check
          %p973 = pneg %p323
        $region104: #{scinet_tree_forward.2} parent=101 // pred_check_branch
          %975 = sbr.rel (%p973) target = $region106
        $region105: #{scinet_tree_forward.2} parent=101 // pred_region
          %s976 = sand.u32 %s308, 1
          %s977 = sand.u32 %s308, 1
          %s978 = smul.addr %s977, 16
          %s979 = scalar_lea.vmem [#allocation2], %s978
        $region106: #{scinet_tree_forward.2} parent=101 // pred_fallthru
          _
      $region102: #{scinet_tree_forward.2} parent=5 // pred_fallthru
        _
    $region6: #{scinet_tree_forward.2} parent=1 // loop_footer
      %s20 = sadd.s32 1, %s16
    $region7: #{scinet_tree_forward.2} parent=1 // loop_footer_branch
      %15 = sbr.rel target = $region3
    $region8: #{scinet_tree_forward.2} parent=1 // loop_exit
      _

// kernel: scinet_tree_forward.3
$region0: #{scinet_tree_forward.3}
  #allocation0 [shape = 'u32[]', space=smem, size = 0x4, offset = 0x4, fixed_abs, tag = 'smem constant byte address 0x4 - core index']
  #allocation1 [shape = 'u32[72,128]{1,0:T(1,128)}', space=vmem, size = 0x9000, scoped, tag = 'internal scratch']
  %s0 = inlined_call_operand.vmem [shape: f32[2,2,8,4], index: 0, kind: input, shape index: {}]
  %s1 = inlined_call_operand.vmem [shape: f32[2,2,8,4], index: 1, kind: input, shape index: {}]
  %s2 = inlined_call_operand.vmem [shape: f32[2,16,80], index: 2, kind: input, shape index: {}]
  %s3 = inlined_call_operand.vmem [shape: f32[2,16,1], index: 3, kind: input, shape index: {}]
  %s4 = inlined_call_operand.vmem [shape: f32[2,16,48], index: 4, kind: input, shape index: {}]
  %s5 = inlined_call_operand.vmem [shape: f32[2,16,1], index: 5, kind: input, shape index: {}]
  %s6 = inlined_call_operand.vmem [shape: f32[2,16,80], index: 6, kind: input, shape index: {}]
  %s7 = inlined_call_operand.vmem [shape: f32[2,16,1], index: 7, kind: input, shape index: {}]
  %s8 = inlined_call_operand.vmem [shape: f32[2,16,48], index: 8, kind: input, shape index: {}]
  %s9 = inlined_call_operand.vmem [shape: f32[2,16,1], index: 9, kind: input, shape index: {}]
  %s10 = inlined_call_operand.vmem [shape: f32[2,2,2,8,4], index: 10, kind: output, shape index: {}]
  %s11 = sld [smem:[#allocation0]]
  $region107: #{scinet_tree_forward.3} parent=0
    _
  %s13 = ssub.s32 1, %s11
  %s14 = scalar_select 0, %s13, %s11
  $region1: #{scinet_tree_forward.3} parent=0
    #allocation2 [shape = 'u8[16384]{0}', space=vmem, size = 0x4000, scoped, tag = 'output window, operand 0']
    loop: start=0, step=1, limit=6
    $region2: #{scinet_tree_forward.3} parent=1 // loop_pre_header
      _
    $region3: #{scinet_tree_forward.3} parent=1 // loop_header
      %s16 = sphi 0, %s20
      %p17 = scmp.ge.s32.totalorder %s16, 6
      %s23 = sphi 0, %s35
      %s24 = sphi 0, %s31
      %s25 = sphi 0, %s23
      %s26 = sphi 0, %s24
      %s27 = sphi 0, %s25
      %s28 = sphi 0, %s26
      %s40 = sphi 0, %s42
      %s43 = sphi 0, %s40
      %s44 = sphi 0, %s43
      %s60 = sphi 0, %s44
      %s68 = sphi 0, %s70
      %s71 = sphi 0, %s68
      %s72 = sphi 0, %s71
      %s88 = sphi 0, %s72
      %s94 = sphi 0, %s96
      %s97 = sphi 0, %s94
      %s98 = sphi 0, %s97
      %s114 = sphi 0, %s98
      %s120 = sphi 0, %s122
      %s123 = sphi 0, %s120
      %s124 = sphi 0, %s123
      %s140 = sphi 0, %s124
      %s146 = sphi 0, %s148
      %s149 = sphi 0, %s146
      %s150 = sphi 0, %s149
      %s166 = sphi 0, %s150
      %s172 = sphi 0, %s174
      %s175 = sphi 0, %s172
      %s176 = sphi 0, %s175
      %s192 = sphi 0, %s176
      %s198 = sphi 0, %s200
      %s201 = sphi 0, %s198
      %s202 = sphi 0, %s201
      %s218 = sphi 0, %s202
      %s224 = sphi 0, %s226
      %s227 = sphi 0, %s224
      %s228 = sphi 0, %s227
      %s244 = sphi 0, %s228
      %s250 = sphi 0, %s252
      %s253 = sphi 0, %s250
      %s254 = sphi 0, %s253
      %s270 = sphi 0, %s254
      %s276 = sphi 0, %s278
      %s279 = sphi 0, %s276
      %s280 = sphi 0, %s279
      %s296 = sphi 0, %s280
      %s304 = sphi 0, %s306
      %s307 = sphi 0, %s304
      %s308 = sphi 0, %s307
      %s324 = sphi 0, %s308
    $region4: #{scinet_tree_forward.3} parent=1 // loop_header_branch
      %19 = sbr.rel (%p17) target = $region8
    $region5: #{scinet_tree_forward.3} parent=1 // loop_body
      %s21 = ssub.s32 %s16, 1
      %s22 = ssub.s32 %s16, 2
      %s29 = sadd.s32 1, %s24
      %p30 = scmp.ge.s32.totalorder %s29, 2
      %s31 = scalar_select %p30, 0, %s29
      %s32 = sadd.s32 1, %s23
      %s33 = scalar_select %p30, %s32, %s23
      %p34 = scmp.ge.s32.totalorder %s33, 2
      %s35 = scalar_select %p34, 0, %s33
      %s36 = ssub.s32 %s23, %s35
      %s37 = ssub.s32 %s24, %s31
      %s38 = sor.u32 %s36, %s37
      %p39 = scmp.eq.s32.totalorder %s38, 0
      %s41 = sadd.s32 %s40, 1
      %s42 = scalar_select %p39, %s40, %s41
      %p45 = pneg %p39
      %p46 = scmp.eq.s32.totalorder %s16, 3
      %p47 = por %p45, %p46
      %p48 = scmp.ne.s32.totalorder %s40, %s43
      %p49 = scmp.eq.s32.totalorder %s16, 0
      %p50 = por %p48, %p49
      %p51 = scmp.ne.s32.totalorder %s40, %s43
      %p52 = scmp.eq.s32.totalorder %s21, 3
      %p53 = por %p51, %p52
      %p54 = scmp.ne.s32.totalorder %s43, %s44
      %p55 = scmp.eq.s32.totalorder %s21, 0
      %p56 = por %p54, %p55
      %p57 = scmp.ne.s32.totalorder %s43, %s44
      %p58 = scmp.eq.s32.totalorder %s22, 3
      %p59 = por %p57, %p58
      %p61 = scmp.ne.s32.totalorder %s44, %s60
      %p62 = scmp.eq.s32.totalorder %s22, 0
      %p63 = por %p61, %p62
      %s64 = ssub.s32 %s23, %s35
      %s65 = ssub.s32 %s24, %s31
      %s66 = sor.u32 %s64, %s65
      %p67 = scmp.eq.s32.totalorder %s66, 0
      %s69 = sadd.s32 %s68, 1
      %s70 = scalar_select %p67, %s68, %s69
      %p73 = pneg %p67
      %p74 = scmp.eq.s32.totalorder %s16, 3
      %p75 = por %p73, %p74
      %p76 = scmp.ne.s32.totalorder %s68, %s71
      %p77 = scmp.eq.s32.totalorder %s16, 0
      %p78 = por %p76, %p77
      %p79 = scmp.ne.s32.totalorder %s68, %s71
      %p80 = scmp.eq.s32.totalorder %s21, 3
      %p81 = por %p79, %p80
      %p82 = scmp.ne.s32.totalorder %s71, %s72
      %p83 = scmp.eq.s32.totalorder %s21, 0
      %p84 = por %p82, %p83
      %p85 = scmp.ne.s32.totalorder %s71, %s72
      %p86 = scmp.eq.s32.totalorder %s22, 3
      %p87 = por %p85, %p86
      %p89 = scmp.ne.s32.totalorder %s72, %s88
      %p90 = scmp.eq.s32.totalorder %s22, 0
      %p91 = por %p89, %p90
      %s92 = ssub.s32 %s23, %s35
      %p93 = scmp.eq.s32.totalorder %s92, 0
      %s95 = sadd.s32 %s94, 1
      %s96 = scalar_select %p93, %s94, %s95
      %p99 = pneg %p93
      %p100 = scmp.eq.s32.totalorder %s16, 3
      %p101 = por %p99, %p100
      %p102 = scmp.ne.s32.totalorder %s94, %s97
      %p103 = scmp.eq.s32.totalorder %s16, 0
      %p104 = por %p102, %p103
      %p105 = scmp.ne.s32.totalorder %s94, %s97
      %p106 = scmp.eq.s32.totalorder %s21, 3
      %p107 = por %p105, %p106
      %p108 = scmp.ne.s32.totalorder %s97, %s98
      %p109 = scmp.eq.s32.totalorder %s21, 0
      %p110 = por %p108, %p109
      %p111 = scmp.ne.s32.totalorder %s97, %s98
      %p112 = scmp.eq.s32.totalorder %s22, 3
      %p113 = por %p111, %p112
      %p115 = scmp.ne.s32.totalorder %s98, %s114
      %p116 = scmp.eq.s32.totalorder %s22, 0
      %p117 = por %p115, %p116
      %s118 = ssub.s32 %s23, %s35
      %p119 = scmp.eq.s32.totalorder %s118, 0
      %s121 = sadd.s32 %s120, 1
      %s122 = scalar_select %p119, %s120, %s121
      %p125 = pneg %p119
      %p126 = scmp.eq.s32.totalorder %s16, 3
      %p127 = por %p125, %p126
      %p128 = scmp.ne.s32.totalorder %s120, %s123
      %p129 = scmp.eq.s32.totalorder %s16, 0
      %p130 = por %p128, %p129
      %p131 = scmp.ne.s32.totalorder %s120, %s123
      %p132 = scmp.eq.s32.totalorder %s21, 3
      %p133 = por %p131, %p132
      %p134 = scmp.ne.s32.totalorder %s123, %s124
      %p135 = scmp.eq.s32.totalorder %s21, 0
      %p136 = por %p134, %p135
      %p137 = scmp.ne.s32.totalorder %s123, %s124
      %p138 = scmp.eq.s32.totalorder %s22, 3
      %p139 = por %p137, %p138
      %p141 = scmp.ne.s32.totalorder %s124, %s140
      %p142 = scmp.eq.s32.totalorder %s22, 0
      %p143 = por %p141, %p142
      %s144 = ssub.s32 %s23, %s35
      %p145 = scmp.eq.s32.totalorder %s144, 0
      %s147 = sadd.s32 %s146, 1
      %s148 = scalar_select %p145, %s146, %s147
      %p151 = pneg %p145
      %p152 = scmp.eq.s32.totalorder %s16, 3
      %p153 = por %p151, %p152
      %p154 = scmp.ne.s32.totalorder %s146, %s149
      %p155 = scmp.eq.s32.totalorder %s16, 0
      %p156 = por %p154, %p155
      %p157 = scmp.ne.s32.totalorder %s146, %s149
      %p158 = scmp.eq.s32.totalorder %s21, 3
      %p159 = por %p157, %p158
      %p160 = scmp.ne.s32.totalorder %s149, %s150
      %p161 = scmp.eq.s32.totalorder %s21, 0
      %p162 = por %p160, %p161
      %p163 = scmp.ne.s32.totalorder %s149, %s150
      %p164 = scmp.eq.s32.totalorder %s22, 3
      %p165 = por %p163, %p164
      %p167 = scmp.ne.s32.totalorder %s150, %s166
      %p168 = scmp.eq.s32.totalorder %s22, 0
      %p169 = por %p167, %p168
      %s170 = ssub.s32 %s23, %s35
      %p171 = scmp.eq.s32.totalorder %s170, 0
      %s173 = sadd.s32 %s172, 1
      %s174 = scalar_select %p171, %s172, %s173
      %p177 = pneg %p171
      %p178 = scmp.eq.s32.totalorder %s16, 3
      %p179 = por %p177, %p178
      %p180 = scmp.ne.s32.totalorder %s172, %s175
      %p181 = scmp.eq.s32.totalorder %s16, 0
      %p182 = por %p180, %p181
      %p183 = scmp.ne.s32.totalorder %s172, %s175
      %p184 = scmp.eq.s32.totalorder %s21, 3
      %p185 = por %p183, %p184
      %p186 = scmp.ne.s32.totalorder %s175, %s176
      %p187 = scmp.eq.s32.totalorder %s21, 0
      %p188 = por %p186, %p187
      %p189 = scmp.ne.s32.totalorder %s175, %s176
      %p190 = scmp.eq.s32.totalorder %s22, 3
      %p191 = por %p189, %p190
      %p193 = scmp.ne.s32.totalorder %s176, %s192
      %p194 = scmp.eq.s32.totalorder %s22, 0
      %p195 = por %p193, %p194
      %s196 = ssub.s32 %s23, %s35
      %p197 = scmp.eq.s32.totalorder %s196, 0
      %s199 = sadd.s32 %s198, 1
      %s200 = scalar_select %p197, %s198, %s199
      %p203 = pneg %p197
      %p204 = scmp.eq.s32.totalorder %s16, 3
      %p205 = por %p203, %p204
      %p206 = scmp.ne.s32.totalorder %s198, %s201
      %p207 = scmp.eq.s32.totalorder %s16, 0
      %p208 = por %p206, %p207
      %p209 = scmp.ne.s32.totalorder %s198, %s201
      %p210 = scmp.eq.s32.totalorder %s21, 3
      %p211 = por %p209, %p210
      %p212 = scmp.ne.s32.totalorder %s201, %s202
      %p213 = scmp.eq.s32.totalorder %s21, 0
      %p214 = por %p212, %p213
      %p215 = scmp.ne.s32.totalorder %s201, %s202
      %p216 = scmp.eq.s32.totalorder %s22, 3
      %p217 = por %p215, %p216
      %p219 = scmp.ne.s32.totalorder %s202, %s218
      %p220 = scmp.eq.s32.totalorder %s22, 0
      %p221 = por %p219, %p220
      %s222 = ssub.s32 %s23, %s35
      %p223 = scmp.eq.s32.totalorder %s222, 0
      %s225 = sadd.s32 %s224, 1
      %s226 = scalar_select %p223, %s224, %s225
      %p229 = pneg %p223
      %p230 = scmp.eq.s32.totalorder %s16, 3
      %p231 = por %p229, %p230
      %p232 = scmp.ne.s32.totalorder %s224, %s227
      %p233 = scmp.eq.s32.totalorder %s16, 0
      %p234 = por %p232, %p233
      %p235 = scmp.ne.s32.totalorder %s224, %s227
      %p236 = scmp.eq.s32.totalorder %s21, 3
      %p237 = por %p235, %p236
      %p238 = scmp.ne.s32.totalorder %s227, %s228
      %p239 = scmp.eq.s32.totalorder %s21, 0
      %p240 = por %p238, %p239
      %p241 = scmp.ne.s32.totalorder %s227, %s228
      %p242 = scmp.eq.s32.totalorder %s22, 3
      %p243 = por %p241, %p242
      %p245 = scmp.ne.s32.totalorder %s228, %s244
      %p246 = scmp.eq.s32.totalorder %s22, 0
      %p247 = por %p245, %p246
      %s248 = ssub.s32 %s23, %s35
      %p249 = scmp.eq.s32.totalorder %s248, 0
      %s251 = sadd.s32 %s250, 1
      %s252 = scalar_select %p249, %s250, %s251
      %p255 = pneg %p249
      %p256 = scmp.eq.s32.totalorder %s16, 3
      %p257 = por %p255, %p256
      %p258 = scmp.ne.s32.totalorder %s250, %s253
      %p259 = scmp.eq.s32.totalorder %s16, 0
      %p260 = por %p258, %p259
      %p261 = scmp.ne.s32.totalorder %s250, %s253
      %p262 = scmp.eq.s32.totalorder %s21, 3
      %p263 = por %p261, %p262
      %p264 = scmp.ne.s32.totalorder %s253, %s254
      %p265 = scmp.eq.s32.totalorder %s21, 0
      %p266 = por %p264, %p265
      %p267 = scmp.ne.s32.totalorder %s253, %s254
      %p268 = scmp.eq.s32.totalorder %s22, 3
      %p269 = por %p267, %p268
      %p271 = scmp.ne.s32.totalorder %s254, %s270
      %p272 = scmp.eq.s32.totalorder %s22, 0
      %p273 = por %p271, %p272
      %s274 = ssub.s32 %s23, %s35
      %p275 = scmp.eq.s32.totalorder %s274, 0
      %s277 = sadd.s32 %s276, 1
      %s278 = scalar_select %p275, %s276, %s277
      %p281 = pneg %p275
      %p282 = scmp.eq.s32.totalorder %s16, 3
      %p283 = por %p281, %p282
      %p284 = scmp.ne.s32.totalorder %s276, %s279
      %p285 = scmp.eq.s32.totalorder %s16, 0
      %p286 = por %p284, %p285
      %p287 = scmp.ne.s32.totalorder %s276, %s279
      %p288 = scmp.eq.s32.totalorder %s21, 3
      %p289 = por %p287, %p288
      %p290 = scmp.ne.s32.totalorder %s279, %s280
      %p291 = scmp.eq.s32.totalorder %s21, 0
      %p292 = por %p290, %p291
      %p293 = scmp.ne.s32.totalorder %s279, %s280
      %p294 = scmp.eq.s32.totalorder %s22, 3
      %p295 = por %p293, %p294
      %p297 = scmp.ne.s32.totalorder %s280, %s296
      %p298 = scmp.eq.s32.totalorder %s22, 0
      %p299 = por %p297, %p298
      %s300 = ssub.s32 %s23, %s35
      %s301 = ssub.s32 %s24, %s31
      %s302 = sor.u32 %s300, %s301
      %p303 = scmp.eq.s32.totalorder %s302, 0
      %s305 = sadd.s32 %s304, 1
      %s306 = scalar_select %p303, %s304, %s305
      %p309 = pneg %p303
      %p310 = scmp.eq.s32.totalorder %s16, 3
      %p311 = por %p309, %p310
      %p312 = scmp.ne.s32.totalorder %s304, %s307
      %p313 = scmp.eq.s32.totalorder %s16, 0
      %p314 = por %p312, %p313
      %p315 = scmp.ne.s32.totalorder %s304, %s307
      %p316 = scmp.eq.s32.totalorder %s21, 3
      %p317 = por %p315, %p316
      %p318 = scmp.ne.s32.totalorder %s307, %s308
      %p319 = scmp.eq.s32.totalorder %s21, 0
      %p320 = por %p318, %p319
      %p321 = scmp.ne.s32.totalorder %s307, %s308
      %p322 = scmp.eq.s32.totalorder %s22, 3
      %p323 = por %p321, %p322
      %p325 = scmp.ne.s32.totalorder %s308, %s324
      %p326 = scmp.eq.s32.totalorder %s22, 0
      %p327 = por %p325, %p326
      %p328 = scmp.le.s32.totalorder 1, %s16
      %p329 = scmp.lt.s32.totalorder %s16, 5
      %p330 = pnand %p328, %p329
      %p331 = pneg %p330
      // Predicated region
      $region9: #{scinet_tree_forward.3} parent=5 // pred_check
        _
      $region10: #{scinet_tree_forward.3} parent=5 // pred_check_branch
        %333 = sbr.rel (%p330) target = $region12
      $region11: #{scinet_tree_forward.3} parent=5 // pred_region
        %s334 = ssub.s32 %s16, 1
      $region12: #{scinet_tree_forward.3} parent=5 // pred_fallthru
        _
      %p335 = scmp.lt.s32.totalorder %s16, 4
      // Predicated region
      $region13: #{scinet_tree_forward.3} parent=5 // pred_check
        %p336 = pneg %p335
      $region14: #{scinet_tree_forward.3} parent=5 // pred_check_branch
        %338 = sbr.rel (%p336) target = $region16
      $region15: #{scinet_tree_forward.3} parent=5 // pred_region
        // Predicated region
        $region17: #{scinet_tree_forward.3} parent=15 // pred_check
          %p339 = pneg %p50
        $region18: #{scinet_tree_forward.3} parent=15 // pred_check_branch
          %341 = sbr.rel (%p339) target = $region20
        $region19: #{scinet_tree_forward.3} parent=15 // pred_region
          %p342 = scmp.lt.s32.totalorder %s23, 1
          %s343 = scalar_select %p342, %s23, 1
          %p344 = scmp.lt.s32.totalorder %s24, 1
          %s345 = scalar_select %p344, %s24, 1
          %s346 = smul.addr %s343, 2
          %s347 = sadd.s32 %s345, %s346
          %s348 = smul.addr %s347, 8
          %s349 = scalar_lea.vmem %s0, %s348
        $region20: #{scinet_tree_forward.3} parent=15 // pred_fallthru
          _
        // Predicated region
        $region21: #{scinet_tree_forward.3} parent=15 // pred_check
          %p350 = pneg %p78
        $region22: #{scinet_tree_forward.3} parent=15 // pred_check_branch
          %352 = sbr.rel (%p350) target = $region24
        $region23: #{scinet_tree_forward.3} parent=15 // pred_region
          %p353 = scmp.lt.s32.totalorder %s23, 1
          %s354 = scalar_select %p353, %s23, 1
          %p355 = scmp.lt.s32.totalorder %s24, 1
          %s356 = scalar_select %p355, %s24, 1
          %s357 = smul.addr %s354, 2
          %s358 = sadd.s32 %s356, %s357
          %s359 = smul.addr %s358, 8
          %s360 = scalar_lea.vmem %s1, %s359
        $region24: #{scinet_tree_forward.3} parent=15 // pred_fallthru
          _
        // Predicated region
        $region25: #{scinet_tree_forward.3} parent=15 // pred_check
          %p361 = pneg %p104
        $region26: #{scinet_tree_forward.3} parent=15 // pred_check_branch
          %363 = sbr.rel (%p361) target = $region28
        $region27: #{scinet_tree_forward.3} parent=15 // pred_region
          %p364 = scmp.lt.s32.totalorder %s23, 1
          %s365 = scalar_select %p364, %s23, 1
          %s366 = smul.addr %s365, 2
          %s367 = smul.addr %s366, 8
          %s368 = scalar_lea.vmem %s2, %s367
        $region28: #{scinet_tree_forward.3} parent=15 // pred_fallthru
          _
        // Predicated region
        $region29: #{scinet_tree_forward.3} parent=15 // pred_check
          %p369 = pneg %p130
        $region30: #{scinet_tree_forward.3} parent=15 // pred_check_branch
          %371 = sbr.rel (%p369) target = $region32
        $region31: #{scinet_tree_forward.3} parent=15 // pred_region
          %p372 = scmp.lt.s32.totalorder %s23, 1
          %s373 = scalar_select %p372, %s23, 1
          %s374 = smul.addr %s373, 2
          %s375 = smul.addr %s374, 8
          %s376 = scalar_lea.vmem %s3, %s375
        $region32: #{scinet_tree_forward.3} parent=15 // pred_fallthru
          _
        // Predicated region
        $region33: #{scinet_tree_forward.3} parent=15 // pred_check
          %p377 = pneg %p156
        $region34: #{scinet_tree_forward.3} parent=15 // pred_check_branch
          %379 = sbr.rel (%p377) target = $region36
        $region35: #{scinet_tree_forward.3} parent=15 // pred_region
          %p380 = scmp.lt.s32.totalorder %s23, 1
          %s381 = scalar_select %p380, %s23, 1
          %s382 = smul.addr %s381, 2
          %s383 = smul.addr %s382, 8
          %s384 = scalar_lea.vmem %s4, %s383
        $region36: #{scinet_tree_forward.3} parent=15 // pred_fallthru
          _
        // Predicated region
        $region37: #{scinet_tree_forward.3} parent=15 // pred_check
          %p385 = pneg %p182
        $region38: #{scinet_tree_forward.3} parent=15 // pred_check_branch
          %387 = sbr.rel (%p385) target = $region40
        $region39: #{scinet_tree_forward.3} parent=15 // pred_region
          %p388 = scmp.lt.s32.totalorder %s23, 1
          %s389 = scalar_select %p388, %s23, 1
          %s390 = smul.addr %s389, 2
          %s391 = smul.addr %s390, 8
          %s392 = scalar_lea.vmem %s5, %s391
        $region40: #{scinet_tree_forward.3} parent=15 // pred_fallthru
          _
        // Predicated region
        $region41: #{scinet_tree_forward.3} parent=15 // pred_check
          %p393 = pneg %p208
        $region42: #{scinet_tree_forward.3} parent=15 // pred_check_branch
          %395 = sbr.rel (%p393) target = $region44
        $region43: #{scinet_tree_forward.3} parent=15 // pred_region
          %p396 = scmp.lt.s32.totalorder %s23, 1
          %s397 = scalar_select %p396, %s23, 1
          %s398 = smul.addr %s397, 2
          %s399 = smul.addr %s398, 8
          %s400 = scalar_lea.vmem %s6, %s399
        $region44: #{scinet_tree_forward.3} parent=15 // pred_fallthru
          _
        // Predicated region
        $region45: #{scinet_tree_forward.3} parent=15 // pred_check
          %p401 = pneg %p234
        $region46: #{scinet_tree_forward.3} parent=15 // pred_check_branch
          %403 = sbr.rel (%p401) target = $region48
        $region47: #{scinet_tree_forward.3} parent=15 // pred_region
          %p404 = scmp.lt.s32.totalorder %s23, 1
          %s405 = scalar_select %p404, %s23, 1
          %s406 = smul.addr %s405, 2
          %s407 = smul.addr %s406, 8
          %s408 = scalar_lea.vmem %s7, %s407
        $region48: #{scinet_tree_forward.3} parent=15 // pred_fallthru
          _
        // Predicated region
        $region49: #{scinet_tree_forward.3} parent=15 // pred_check
          %p409 = pneg %p260
        $region50: #{scinet_tree_forward.3} parent=15 // pred_check_branch
          %411 = sbr.rel (%p409) target = $region52
        $region51: #{scinet_tree_forward.3} parent=15 // pred_region
          %p412 = scmp.lt.s32.totalorder %s23, 1
          %s413 = scalar_select %p412, %s23, 1
          %s414 = smul.addr %s413, 2
          %s415 = smul.addr %s414, 8
          %s416 = scalar_lea.vmem %s8, %s415
        $region52: #{scinet_tree_forward.3} parent=15 // pred_fallthru
          _
        // Predicated region
        $region53: #{scinet_tree_forward.3} parent=15 // pred_check
          %p417 = pneg %p286
        $region54: #{scinet_tree_forward.3} parent=15 // pred_check_branch
          %419 = sbr.rel (%p417) target = $region56
        $region55: #{scinet_tree_forward.3} parent=15 // pred_region
          %p420 = scmp.lt.s32.totalorder %s23, 1
          %s421 = scalar_select %p420, %s23, 1
          %s422 = smul.addr %s421, 2
          %s423 = smul.addr %s422, 8
          %s424 = scalar_lea.vmem %s9, %s423
        $region56: #{scinet_tree_forward.3} parent=15 // pred_fallthru
          _
      $region16: #{scinet_tree_forward.3} parent=5 // pred_fallthru
        _
      %p425 = scmp.le.s32.totalorder 1, %s16
      %p426 = scmp.lt.s32.totalorder %s16, 5
      %p427 = pnand %p425, %p426
      %p428 = pneg %p427
      // Predicated region
      $region57: #{scinet_tree_forward.3} parent=5 // pred_check
        _
      $region58: #{scinet_tree_forward.3} parent=5 // pred_check_branch
        %430 = sbr.rel (%p427) target = $region60
      $region59: #{scinet_tree_forward.3} parent=5 // pred_region
        %s431 = ssub.s32 %s16, 1
        %p432 = scmp.lt.s32.totalorder %s25, 1
        %s433 = scalar_select %p432, %s25, 1
        %p434 = scmp.lt.s32.totalorder %s26, 1
        %s435 = scalar_select %p434, %s26, 1
        %s436 = smul.addr %s433, 2
        %s437 = sadd.s32 %s435, %s436
        %s438 = smul.addr %s437, 8
        %s439 = scalar_lea.vmem %s0, %s438
        %p440 = pneg %p56
        %p441 = pneg %p53
        %p442 = scmp.lt.s32.totalorder %s25, 1
        %s443 = scalar_select %p442, %s25, 1
        %p444 = scmp.lt.s32.totalorder %s26, 1
        %s445 = scalar_select %p444, %s26, 1
        %s446 = smul.addr %s443, 2
        %s447 = sadd.s32 %s445, %s446
        %s448 = smul.addr %s447, 8
        %s449 = scalar_lea.vmem %s1, %s448
        %p450 = pneg %p84
        %p451 = pneg %p81
        %p452 = scmp.lt.s32.totalorder %s25, 1
        %s453 = scalar_select %p452, %s25, 1
        %s454 = smul.addr %s453, 2
        %s455 = smul.addr %s454, 8
        %s456 = scalar_lea.vmem %s2, %s455
        %p457 = pneg %p110
        %p458 = pneg %p107
        %p459 = scmp.lt.s32.totalorder %s25, 1
        %s460 = scalar_select %p459, %s25, 1
        %s461 = smul.addr %s460, 2
        %s462 = smul.addr %s461, 8
        %s463 = scalar_lea.vmem %s3, %s462
        %p464 = pneg %p136
        %p465 = pneg %p133
        %p466 = scmp.lt.s32.totalorder %s25, 1
        %s467 = scalar_select %p466, %s25, 1
        %s468 = smul.addr %s467, 2
        %s469 = smul.addr %s468, 8
        %s470 = scalar_lea.vmem %s4, %s469
        %p471 = pneg %p162
        %p472 = pneg %p159
        %p473 = scmp.lt.s32.totalorder %s25, 1
        %s474 = scalar_select %p473, %s25, 1
        %s475 = smul.addr %s474, 2
        %s476 = smul.addr %s475, 8
        %s477 = scalar_lea.vmem %s5, %s476
        %p478 = pneg %p188
        %p479 = pneg %p185
        %p480 = scmp.lt.s32.totalorder %s25, 1
        %s481 = scalar_select %p480, %s25, 1
        %s482 = smul.addr %s481, 2
        %s483 = smul.addr %s482, 8
        %s484 = scalar_lea.vmem %s6, %s483
        %p485 = pneg %p214
        %p486 = pneg %p211
        %p487 = scmp.lt.s32.totalorder %s25, 1
        %s488 = scalar_select %p487, %s25, 1
        %s489 = smul.addr %s488, 2
        %s490 = smul.addr %s489, 8
        %s491 = scalar_lea.vmem %s7, %s490
        %p492 = pneg %p240
        %p493 = pneg %p237
        %p494 = scmp.lt.s32.totalorder %s25, 1
        %s495 = scalar_select %p494, %s25, 1
        %s496 = smul.addr %s495, 2
        %s497 = smul.addr %s496, 8
        %s498 = scalar_lea.vmem %s8, %s497
        %p499 = pneg %p266
        %p500 = pneg %p263
        %p501 = scmp.lt.s32.totalorder %s25, 1
        %s502 = scalar_select %p501, %s25, 1
        %s503 = smul.addr %s502, 2
        %s504 = smul.addr %s503, 8
        %s505 = scalar_lea.vmem %s9, %s504
        %p506 = pneg %p292
        %p507 = pneg %p289
        %p508 = pneg %p320
        %p509 = pneg %p317
        %s510 = sand.u32 %s307, 1
        %s511 = sand.u32 %s307, 1
        %s512 = smul.addr %s511, 16
        %s513 = scalar_lea.vmem [#allocation2], %s512
        %p514 = scmp.lt.s32.totalorder %s25, 1
        %s515 = scalar_select %p514, %s25, 1
        %p516 = scmp.lt.s32.totalorder %s26, 1
        %s517 = scalar_select %p516, %s26, 1
        %s518 = smul.addr %s515, 2
        %s519 = sadd.s32 %s517, %s518
        %s520 = smul.addr %s519, 8
        %s521 = scalar_lea.vmem %s0, %s520
        %p522 = scmp.lt.s32.totalorder %s25, 1
        %s523 = scalar_select %p522, %s25, 1
        %p524 = scmp.lt.s32.totalorder %s26, 1
        %s525 = scalar_select %p524, %s26, 1
        %s526 = smul.addr %s523, 2
        %s527 = sadd.s32 %s525, %s526
        %s528 = smul.addr %s527, 8
        %s529 = scalar_lea.vmem %s1, %s528
        %p530 = scmp.lt.s32.totalorder %s25, 1
        %s531 = scalar_select %p530, %s25, 1
        %s532 = smul.addr %s531, 2
        %s533 = smul.addr %s532, 8
        %s534 = scalar_lea.vmem %s2, %s533
        %p535 = scmp.lt.s32.totalorder %s25, 1
        %s536 = scalar_select %p535, %s25, 1
        %s537 = smul.addr %s536, 2
        %s538 = smul.addr %s537, 8
        %s539 = scalar_lea.vmem %s3, %s538
        %p540 = scmp.lt.s32.totalorder %s25, 1
        %s541 = scalar_select %p540, %s25, 1
        %s542 = smul.addr %s541, 2
        %s543 = smul.addr %s542, 8
        %s544 = scalar_lea.vmem %s4, %s543
        %p545 = scmp.lt.s32.totalorder %s25, 1
        %s546 = scalar_select %p545, %s25, 1
        %s547 = smul.addr %s546, 2
        %s548 = smul.addr %s547, 8
        %s549 = scalar_lea.vmem %s5, %s548
        %p550 = scmp.lt.s32.totalorder %s25, 1
        %s551 = scalar_select %p550, %s25, 1
        %s552 = smul.addr %s551, 2
        %s553 = smul.addr %s552, 8
        %s554 = scalar_lea.vmem %s6, %s553
        %p555 = scmp.lt.s32.totalorder %s25, 1
        %s556 = scalar_select %p555, %s25, 1
        %s557 = smul.addr %s556, 2
        %s558 = smul.addr %s557, 8
        %s559 = scalar_lea.vmem %s7, %s558
        %p560 = scmp.lt.s32.totalorder %s25, 1
        %s561 = scalar_select %p560, %s25, 1
        %s562 = smul.addr %s561, 2
        %s563 = smul.addr %s562, 8
        %s564 = scalar_lea.vmem %s8, %s563
        %p565 = scmp.lt.s32.totalorder %s25, 1
        %s566 = scalar_select %p565, %s25, 1
        %s567 = smul.addr %s566, 2
        %s568 = smul.addr %s567, 8
        %s569 = scalar_lea.vmem %s9, %s568
        %v570 = vld [vmem:[%s521] sm:$0xff]
        %v571 = vld [vmem:[%s529] sm:$0xff]
        %573 = vset.pattern.permute.xlu0 0
        %574 = vperm.xlu0 %573, %v570
        %v575 = vpop.permute.xlu0 %574
        %577 = vset.pattern.permute.xlu0 3
        %578 = vperm.xlu0 %577, %v570
        %v579 = vpop.permute.xlu0 %578
        %581 = vrot.lane.b32.xlu0 %v570, 3
        %v582 = vpop.permute.xlu0 %581
        %vm584 = vcmask 23552
        %v585 = vsel %vm584, %v575, %v582
        %vm586 = vcmask 56320
        %v587 = vsel %vm586, %v585, %v579
        %589 = vset.pattern.permute.xlu0 0
        %590 = vperm.xlu0 %589, %v571
        %v591 = vpop.permute.xlu0 %590
        %593 = vset.pattern.permute.xlu0 3
        %594 = vperm.xlu0 %593, %v571
        %v595 = vpop.permute.xlu0 %594
        %597 = vrot.lane.b32.xlu0 %v571, 3
        %v598 = vpop.permute.xlu0 %597
        %v600 = vsel %vm584, %v591, %v598
        %v601 = vsel %vm586, %v600, %v595
        %603 = vrot.lane.b32.xlu0 %v587, 127
        %v604 = vpop.permute.xlu0 %603
        %606 = vrot.lane.b32.xlu0 %v587, 126
        %v607 = vpop.permute.xlu0 %606
        %609 = vrot.lane.b32.xlu0 %v587, 125
        %v610 = vpop.permute.xlu0 %609
        %612 = vrot.lane.b32.xlu0 %v587, 124
        %v613 = vpop.permute.xlu0 %612
        %616 = vrot.lane.b32.xlu0 %v601, 127
        %v617 = vpop.permute.xlu0 %616
        %619 = vrot.lane.b32.xlu0 %v601, 126
        %v620 = vpop.permute.xlu0 %619
        %622 = vrot.lane.b32.xlu0 %v601, 125
        %v623 = vpop.permute.xlu0 %622
        %625 = vrot.lane.b32.xlu0 %v601, 124
        %v626 = vpop.permute.xlu0 %625
        %v628 = vld [vmem:[%s534] sm:$0xff]
        %v629 = vld [vmem:[%s534 + $0x8] sm:$0xff]
        %vm630 = vcmask 654336
        %v632 = vsel %vm630, %v628, 0
        %v635 = vsel %vm630, %v629, 0
        %637 = vmatpush.msra.mxu0 0.0
        %638 = vmatpush.msra.mxu0 0.0
        %639 = vmatpush.msra.mxu0 0.0
        %640 = vmatpush.msra.mxu0 0.0
        %641 = vmatpush.msra.mxu0 0.0
        %642 = vmatpush.msra.mxu0 0.0
        %643 = vmatpush.msra.mxu0 %v626
        %644 = vmatpush.msra.mxu0 %v623
        %645 = vmatpush.msra.mxu0 %v620
        %646 = vmatpush.msra.mxu0 %v617
        %647 = vmatpush.msra.mxu0 %v601
        %648 = vmatpush.msra.mxu0 %v613
        %649 = vmatpush.msra.mxu0 %v610
        %650 = vmatpush.msra.mxu0 %v607
        %651 = vmatpush.msra.mxu0 %v604
        %652 = vmatpush.msra.mxu0 %v587
        %653 = vmatmul.f32.gmra.mxu0 %v632
        %v654 = vpop.f32.mrf.mxu0
        %v655 = vadd.f32 0.0, %v654
        %656 = vmatmul.f32.gmra.mxu0 %v635
        %v657 = vpop.f32.mrf.mxu0
        %v658 = vadd.f32 0.0, %v657
        %659 = vdwg.mxu0
        %v660 = vld [vmem:[%s539] sm:$0xff]
        %v661 = vld [vmem:[%s539 + $0x8] sm:$0xff]
        %663 = vset.pattern.permute.xlu0 0
        %664 = vperm.xlu0 %663, %v660
        %v665 = vpop.permute.xlu0 %664
        %668 = vset.pattern.permute.xlu0 0
        %669 = vperm.xlu0 %668, %v661
        %v670 = vpop.permute.xlu0 %669
        %v672 = vadd.f32 %v655, %v665
        %v673 = vadd.f32 %v658, %v670
        %vm674 = vcmp.gt.f32.partialorder %v672, 0.0
        %vm675 = vcmp.gt.f32.partialorder %v673, 0.0
        %v676 = vmul.f32 %v672, 0.01
        %v677 = vmul.f32 %v673, 0.01
        %v678 = vsel %vm674, %v672, %v676
        %v679 = vsel %vm675, %v673, %v677
        %682 = vrot.lane.b32.xlu0 %v678, 127
        %v683 = vpop.permute.xlu0 %682
        %684 = vrot.lane.b32.xlu0 %v679, 127
        %v685 = vpop.permute.xlu0 %684
        %688 = vrot.lane.b32.xlu0 %v678, 126
        %v689 = vpop.permute.xlu0 %688
        %690 = vrot.lane.b32.xlu0 %v679, 126
        %v691 = vpop.permute.xlu0 %690
        %v694 = vld [vmem:[%s544] sm:$0xff]
        %v695 = vld [vmem:[%s544 + $0x8] sm:$0xff]
        %vm696 = vcmask 392192
        %v698 = vsel %vm696, %v694, 0
        %v701 = vsel %vm696, %v695, 0
        %703 = vmatpush.msra.mxu0 0.0
        %704 = vmatpush.msra.mxu0 0.0
        %705 = vmatpush.msra.mxu0 0.0
        %706 = vmatpush.msra.mxu0 0.0
        %707 = vmatpush.msra.mxu0 0.0
        %708 = vmatpush.msra.mxu0 0.0
        %709 = vmatpush.msra.mxu0 0.0
        %710 = vmatpush.msra.mxu0 0.0
        %711 = vmatpush.msra.mxu0 0.0
        %712 = vmatpush.msra.mxu0 0.0
        %713 = vmatpush.msra.mxu0 %v691
        %714 = vmatpush.msra.mxu0 %v689
        %715 = vmatpush.msra.mxu0 %v685
        %716 = vmatpush.msra.mxu0 %v683
        %717 = vmatpush.msra.mxu0 %v679
        %718 = vmatpush.msra.mxu0 %v678
        %719 = vmatmul.f32.gmra.mxu0 %v698
        %v720 = vpop.f32.mrf.mxu0
        %v721 = vadd.f32 0.0, %v720
        %722 = vmatmul.f32.gmra.mxu0 %v701
        %v723 = vpop.f32.mrf.mxu0
        %v724 = vadd.f32 0.0, %v723
        %725 = vdwg.mxu0
        %v726 = vld [vmem:[%s549] sm:$0xff]
        %v727 = vld [vmem:[%s549 + $0x8] sm:$0xff]
        %729 = vset.pattern.permute.xlu0 0
        %730 = vperm.xlu0 %729, %v726
        %v731 = vpop.permute.xlu0 %730
        %734 = vset.pattern.permute.xlu0 0
        %735 = vperm.xlu0 %734, %v727
        %v736 = vpop.permute.xlu0 %735
        %v738 = vadd.f32 %v721, %v731
        %v739 = vadd.f32 %v724, %v736
        %v740 = vtanh.pop %v738
        %v741 = vtanh.pop %v739
        %v742 = vmul.f32 %v740, 1.442695
        %v743 = vpow.pop %v742
        %v744 = vmul.f32 %v571, %v743
        %v745 = vmul.f32 %v741, 1.442695
        %v746 = vpow.pop %v745
        %v747 = vmul.f32 %v570, %v746
        %749 = vset.pattern.permute.xlu0 0
        %750 = vperm.xlu0 %749, %v744
        %v751 = vpop.permute.xlu0 %750
        %753 = vset.pattern.permute.xlu0 3
        %754 = vperm.xlu0 %753, %v744
        %v755 = vpop.permute.xlu0 %754
        %757 = vrot.lane.b32.xlu0 %v744, 3
        %v758 = vpop.permute.xlu0 %757
        %v760 = vsel %vm584, %v751, %v758
        %v761 = vsel %vm586, %v760, %v755
        %763 = vset.pattern.permute.xlu0 0
        %764 = vperm.xlu0 %763, %v747
        %v765 = vpop.permute.xlu0 %764
        %767 = vset.pattern.permute.xlu0 3
        %768 = vperm.xlu0 %767, %v747
        %v769 = vpop.permute.xlu0 %768
        %771 = vrot.lane.b32.xlu0 %v747, 3
        %v772 = vpop.permute.xlu0 %771
        %v774 = vsel %vm584, %v765, %v772
        %v775 = vsel %vm586, %v774, %v769
        %777 = vrot.lane.b32.xlu0 %v761, 127
        %v778 = vpop.permute.xlu0 %777
        %780 = vrot.lane.b32.xlu0 %v761, 126
        %v781 = vpop.permute.xlu0 %780
        %783 = vrot.lane.b32.xlu0 %v761, 125
        %v784 = vpop.permute.xlu0 %783
        %786 = vrot.lane.b32.xlu0 %v761, 124
        %v787 = vpop.permute.xlu0 %786
        %790 = vrot.lane.b32.xlu0 %v775, 127
        %v791 = vpop.permute.xlu0 %790
        %793 = vrot.lane.b32.xlu0 %v775, 126
        %v794 = vpop.permute.xlu0 %793
        %796 = vrot.lane.b32.xlu0 %v775, 125
        %v797 = vpop.permute.xlu0 %796
        %799 = vrot.lane.b32.xlu0 %v775, 124
        %v800 = vpop.permute.xlu0 %799
        %v802 = vld [vmem:[%s554] sm:$0xff]
        %v803 = vld [vmem:[%s554 + $0x8] sm:$0xff]
        %v805 = vsel %vm630, %v802, 0
        %v808 = vsel %vm630, %v803, 0
        %810 = vmatpush.msra.mxu0 0.0
        %811 = vmatpush.msra.mxu0 0.0
        %812 = vmatpush.msra.mxu0 0.0
        %813 = vmatpush.msra.mxu0 0.0
        %814 = vmatpush.msra.mxu0 0.0
        %815 = vmatpush.msra.mxu0 0.0
        %816 = vmatpush.msra.mxu0 %v800
        %817 = vmatpush.msra.mxu0 %v797
        %818 = vmatpush.msra.mxu0 %v794
        %819 = vmatpush.msra.mxu0 %v791
        %820 = vmatpush.msra.mxu0 %v775
        %821 = vmatpush.msra.mxu0 %v787
        %822 = vmatpush.msra.mxu0 %v784
        %823 = vmatpush.msra.mxu0 %v781
        %824 = vmatpush.msra.mxu0 %v778
        %825 = vmatpush.msra.mxu0 %v761
        %826 = vmatmul.f32.gmra.mxu0 %v805
        %v827 = vpop.f32.mrf.mxu0
        %v828 = vadd.f32 0.0, %v827
        %829 = vmatmul.f32.gmra.mxu0 %v808
        %v830 = vpop.f32.mrf.mxu0
        %v831 = vadd.f32 0.0, %v830
        %832 = vdwg.mxu0
        %v833 = vld [vmem:[%s559] sm:$0xff]
        %v834 = vld [vmem:[%s559 + $0x8] sm:$0xff]
        %836 = vset.pattern.permute.xlu0 0
        %837 = vperm.xlu0 %836, %v833
        %v838 = vpop.permute.xlu0 %837
        %841 = vset.pattern.permute.xlu0 0
        %842 = vperm.xlu0 %841, %v834
        %v843 = vpop.permute.xlu0 %842
        %v845 = vadd.f32 %v828, %v838
        %v846 = vadd.f32 %v831, %v843
        %vm847 = vcmp.gt.f32.partialorder %v845, 0.0
        %vm848 = vcmp.gt.f32.partialorder %v846, 0.0
        %v849 = vmul.f32 %v845, 0.01
        %v850 = vmul.f32 %v846, 0.01
        %v851 = vsel %vm847, %v845, %v849
        %v852 = vsel %vm848, %v846, %v850
        %855 = vrot.lane.b32.xlu0 %v851, 127
        %v856 = vpop.permute.xlu0 %855
        %857 = vrot.lane.b32.xlu0 %v852, 127
        %v858 = vpop.permute.xlu0 %857
        %861 = vrot.lane.b32.xlu0 %v851, 126
        %v862 = vpop.permute.xlu0 %861
        %863 = vrot.lane.b32.xlu0 %v852, 126
        %v864 = vpop.permute.xlu0 %863
        %v867 = vld [vmem:[%s564] sm:$0xff]
        %v868 = vld [vmem:[%s564 + $0x8] sm:$0xff]
        %v870 = vsel %vm696, %v867, 0
        %v873 = vsel %vm696, %v868, 0
        %875 = vmatpush.msra.mxu0 0.0
        %876 = vmatpush.msra.mxu0 0.0
        %877 = vmatpush.msra.mxu0 0.0
        %878 = vmatpush.msra.mxu0 0.0
        %879 = vmatpush.msra.mxu0 0.0
        %880 = vmatpush.msra.mxu0 0.0
        %881 = vmatpush.msra.mxu0 0.0
        %882 = vmatpush.msra.mxu0 0.0
        %883 = vmatpush.msra.mxu0 0.0
        %884 = vmatpush.msra.mxu0 0.0
        %885 = vmatpush.msra.mxu0 %v864
        %886 = vmatpush.msra.mxu0 %v862
        %887 = vmatpush.msra.mxu0 %v858
        %888 = vmatpush.msra.mxu0 %v856
        %889 = vmatpush.msra.mxu0 %v852
        %890 = vmatpush.msra.mxu0 %v851
        %891 = vmatmul.f32.gmra.mxu0 %v870
        %v892 = vpop.f32.mrf.mxu0
        %v893 = vadd.f32 0.0, %v892
        %894 = vmatmul.f32.gmra.mxu0 %v873
        %v895 = vpop.f32.mrf.mxu0
        %v896 = vadd.f32 0.0, %v895
        %897 = vdwg.mxu0
        %v898 = vld [vmem:[%s569] sm:$0xff]
        %v899 = vld [vmem:[%s569 + $0x8] sm:$0xff]
        %901 = vset.pattern.permute.xlu0 0
        %902 = vperm.xlu0 %901, %v898
        %v903 = vpop.permute.xlu0 %902
        %906 = vset.pattern.permute.xlu0 0
        %907 = vperm.xlu0 %906, %v899
        %v908 = vpop.permute.xlu0 %907
        %v910 = vadd.f32 %v893, %v903
        %v911 = vadd.f32 %v896, %v908
        %v912 = vtanh.pop %v910
        %v913 = vtanh.pop %v911
        %v914 = vadd.f32 %v747, %v912
        %vm915 = vcmask 31744
        %916 = vst.msk [vmem:[%s513] sm:$0xff] %vm915, %v914
        %v917 = vsub.f32 %v744, %v913
        %s918 = scalar_lea.vmem %s513, 8 [#allocation2]
        %919 = vst.msk [vmem:[%s918] sm:$0xff] %vm915, %v917
        %s920 = sand.u32 %s307, 1
        %s921 = sand.u32 %s307, 1
        %s922 = smul.addr %s921, 16
        %s923 = scalar_lea.vmem [#allocation2], %s922
        // Predicated region
        $region61: #{scinet_tree_forward.3} parent=59 // pred_check
          %p924 = pneg %p317
        $region62: #{scinet_tree_forward.3} parent=59 // pred_check_branch
          %926 = sbr.rel (%p924) target = $region64
        $region63: #{scinet_tree_forward.3} parent=59 // pred_region
          %s927 = smul.addr %s25, 4
          %s928 = sadd.s32 %s26, %s927
          %s929 = smul.addr %s928, 8
          %s930 = scalar_lea.vmem %s10, %s929
          // Predicated region
          $region65: #{scinet_tree_forward.3} parent=63 // pred_check
            _
          $region66: #{scinet_tree_forward.3} parent=63 // pred_check_branch
            %932 = sbr.rel (0) target = $region68
          $region67: #{scinet_tree_forward.3} parent=63 // pred_region
            // Predicated region
            $region69: #{scinet_tree_forward.3} parent=67 // pred_check
              _
            $region70: #{scinet_tree_forward.3} parent=67 // pred_check_branch
              %934 = sbr.rel (0) target = $region72
            $region71: #{scinet_tree_forward.3} parent=67 // pred_region
              // Predicated region
              $region84: #{scinet_tree_forward.3} parent=71 // pred_check
                _
              $region85: #{scinet_tree_forward.3} parent=71 // pred_check_branch
                %952 = sbr.rel (0) target = $region87
              $region86: #{scinet_tree_forward.3} parent=71 // pred_region
                loop: start=0, step=1, limit=1
                $region88: #{scinet_tree_forward.3} parent=86 // loop_pre_header
                  _
                $region89: #{scinet_tree_forward.3} parent=86 // loop_header
                  %s954 = sphi 0, %s958
                  %p955 = scmp.ge.s32.totalorder %s954, 1
                  %s959 = sphi %s923, %s923
                  %s960 = sphi %s930, %s930
                $region90: #{scinet_tree_forward.3} parent=86 // loop_header_branch
                  %957 = sbr.rel (%p955) target = $region94
                $region91: #{scinet_tree_forward.3} parent=86 // loop_body
                  %v961 = vld [vmem:[%s959] sm:$0xff]
                  %962 = vst [vmem:[%s960] sm:$0xff] %v961
                  %v963 = vld [vmem:[%s959 + $0x8] sm:$0xff]
                  %964 = vst [vmem:[%s960 + $0x10] sm:$0xff] %v963
                $region92: #{scinet_tree_forward.3} parent=86 // loop_footer
                  %s958 = sadd.s32 1, %s954
                $region93: #{scinet_tree_forward.3} parent=86 // loop_footer_branch
                  %953 = sbr.rel target = $region89
                $region94: #{scinet_tree_forward.3} parent=86 // loop_exit
                  _
              $region87: #{scinet_tree_forward.3} parent=71 // pred_fallthru
                _
              // Predicated region
              $region95: #{scinet_tree_forward.3} parent=71 // pred_check
                _
              $region96: #{scinet_tree_forward.3} parent=71 // pred_check_branch
                %966 = sbr.rel target = $region98
              $region97: #{scinet_tree_forward.3} parent=71 // pred_region
                _
              $region98: #{scinet_tree_forward.3} parent=71 // pred_fallthru
                _
            $region72: #{scinet_tree_forward.3} parent=67 // pred_fallthru
              _
            // Predicated region
            $region73: #{scinet_tree_forward.3} parent=67 // pred_check
              _
            $region74: #{scinet_tree_forward.3} parent=67 // pred_check_branch
              %936 = sbr.rel target = $region76
            $region75: #{scinet_tree_forward.3} parent=67 // pred_region
              %s938 = ssub.s32 256, 1
              loop: start=0, step=1, limit=1
              $region77: #{scinet_tree_forward.3} parent=75 // loop_pre_header
                _
              $region78: #{scinet_tree_forward.3} parent=75 // loop_header
                %s940 = sphi 0, %s944
                %p941 = scmp.ge.s32.totalorder %s940, 1
                %s945 = sphi %s923, %s923
                %s946 = sphi %s930, %s930
              $region79: #{scinet_tree_forward.3} parent=75 // loop_header_branch
                %943 = sbr.rel (%p941) target = $region83
              $region80: #{scinet_tree_forward.3} parent=75 // loop_body
                %v947 = vld [vmem:[%s945] sm:%s938]
                %948 = vst [vmem:[%s946] sm:%s938] %v947
                %v949 = vld [vmem:[%s945 + $0x8] sm:%s938]
                %950 = vst [vmem:[%s946 + $0x10] sm:%s938] %v949
              $region81: #{scinet_tree_forward.3} parent=75 // loop_footer
                %s944 = sadd.s32 1, %s940
              $region82: #{scinet_tree_forward.3} parent=75 // loop_footer_branch
                %939 = sbr.rel target = $region78
              $region83: #{scinet_tree_forward.3} parent=75 // loop_exit
                _
            $region76: #{scinet_tree_forward.3} parent=67 // pred_fallthru
              _
          $region68: #{scinet_tree_forward.3} parent=63 // pred_fallthru
            _
          %967 = vnop
        $region64: #{scinet_tree_forward.3} parent=59 // pred_fallthru
          _
      $region60: #{scinet_tree_forward.3} parent=5 // pred_fallthru
        _
      %p968 = scmp.le.s32.totalorder 2, %s16
      // Predicated region
      $region99: #{scinet_tree_forward.3} parent=5 // pred_check
        %p969 = pneg %p968
      $region100: #{scinet_tree_forward.3} parent=5 // pred_check_branch
        %971 = sbr.rel (%p969) target = $region102
      $region101: #{scinet_tree_forward.3} parent=5 // pred_region
        %s972 = ssub.s32 %s16, 2
        // Predicated region
        $region103: #{scinet_tree_forward.3} parent=101 // pred_check
          %p973 = pneg %p323
        $region104: #{scinet_tree_forward.3} parent=101 // pred_check_branch
          %975 = sbr.rel (%p973) target = $region106
        $region105: #{scinet_tree_forward.3} parent=101 // pred_region
          %s976 = sand.u32 %s308, 1
          %s977 = sand.u32 %s308, 1
          %s978 = smul.addr %s977, 16
          %s979 = scalar_lea.vmem [#allocation2], %s978
        $region106: #{scinet_tree_forward.3} parent=101 // pred_fallthru
          _
      $region102: #{scinet_tree_forward.3} parent=5 // pred_fallthru
        _
    $region6: #{scinet_tree_forward.3} parent=1 // loop_footer
      %s20 = sadd.s32 1, %s16
    $region7: #{scinet_tree_forward.3} parent=1 // loop_footer_branch
      %15 = sbr.rel target = $region3
    $region8: #{scinet_tree_forward.3} parent=1 // loop_exit
      _

</llo_original>
